<compile_context>
chip_gen: v6e
topology: v6e:2x2x1
jax: 0.10.0
libtpu: 0.0.40
codegen_flags: <defaults>
</compile_context>

<pallas_src>
import functools
import math

import jax
import jax.numpy as jnp
from jax.experimental import pallas as pl
from jax.experimental.pallas import tpu as pltpu


def _round_up(x, m):
    return ((x + m - 1) // m) * m


# ---------------------------------------------------------------------------
# Fused kernel: fc0 + L GCNII layers + fc1.
# ---------------------------------------------------------------------------
def _fused_kernel(theta_ref, x_ref, adj_ref, fc0w_ref, fc0b_ref, convw_ref,
                  fc1w_ref, fc1b_ref, o_ref, h_scr, h0_scr, acc_scr,
                  *, nlayers, alpha, variant, hp, tm, n_k, compute_dtype):
    t = pl.program_id(0)              # stage: 0=fc0, 1..L=GCNII layers, L+1=fc1
    i = pl.program_id(1)              # row tile
    k = pl.program_id(2)              # adj column (K) tile
    row = pl.multiple_of(i * tm, tm)
    cdt = compute_dtype
    tk = adj_ref.shape[-1]            # static (== Np when adj is VMEM-resident)
    col = pl.multiple_of(k * tk, tk)
    is_layer = jnp.logical_and(t >= 1, t <= nlayers)

    # ---- stage 0: h = relu(x @ W0 + b0)  (once per row tile) -----------------
    @pl.when(jnp.logical_and(t == 0, k == 0))
    def _():
        h = jnp.dot(x_ref[...], fc0w_ref[...], preferred_element_type=jnp.float32)
        h = jnp.maximum(h + fc0b_ref[...], 0.0).astype(cdt)
        h_scr[0, pl.ds(row, tm), :] = h
        h0_scr[pl.ds(row, tm), :] = h

    # ---- layer stages: accumulate (adj @ h) over K tiles (f32 accumulator) ---
    @pl.when(jnp.logical_and(is_layer, k == 0))
    def _():
        acc_scr[...] = jnp.zeros_like(acc_scr)

    @pl.when(is_layer)
    def _():
        src = (t - 1) % 2
        h_chunk = h_scr[src, pl.ds(col, tk), :]        # (tk, Hp) compute_dtype
        acc_scr[...] += jnp.dot(adj_ref[...], h_chunk,
                                preferred_element_type=jnp.float32)

    # ---- layer stages: finish the GCNII layer on the last K tile -------------
    @pl.when(jnp.logical_and(is_layer, k == n_k - 1))
    def _():
        li = jnp.clip(t - 1, 0, nlayers - 1)
        theta = theta_ref[li]                          # SMEM scalar
        src = (t - 1) % 2
        dst = t % 2
        hi = acc_scr[...]                              # (tm, Hp) f32
        h_rows = h_scr[src, pl.ds(row, tm), :]         # residual input (cdt)
        h0_rows = h0_scr[pl.ds(row, tm), :]            # (cdt)
        h0_f = h0_rows.astype(jnp.float32)
        if variant:
            # support = cat([hi, h0], 1); support @ W == hi @ W[:H] + h0 @ W[H:]
            w_hi = convw_ref[0, :hp, :]
            w_h0 = convw_ref[0, hp:, :]
            sw = (jnp.dot(hi.astype(cdt), w_hi, preferred_element_type=jnp.float32)
                  + jnp.dot(h0_rows, w_h0, preferred_element_type=jnp.float32))
            r = (1.0 - alpha) * hi + alpha * h0_f
        else:
            r = (1.0 - alpha) * hi + alpha * h0_f      # support == r
            sw = jnp.dot(r.astype(cdt), convw_ref[0],
                         preferred_element_type=jnp.float32)
        out = theta * sw + (1.0 - theta) * r + h_rows.astype(jnp.float32)  # residual=True
        h_scr[dst, pl.ds(row, tm), :] = jnp.maximum(out, 0.0).astype(cdt)  # act_fn=ReLU

    # ---- stage L+1: out = h @ W1 + b1 -----------------------------------------
    @pl.when(jnp.logical_and(t == nlayers + 1, k == 0))
    def _():
        src = nlayers % 2                              # static final slot
        hr = h_scr[src, pl.ds(row, tm), :]
        y = jnp.dot(hr, fc1w_ref[...], preferred_element_type=jnp.float32)
        o_ref[...] = y + fc1b_ref[...]


# ---------------------------------------------------------------------------
# Wrapper: padding, weight stacking/casting, BlockSpecs, pallas_call.
# ---------------------------------------------------------------------------
def graph_plbr_forward(params, x, adj, *, lamda, alpha, variant,
                       compute_dtype=jnp.bfloat16, row_tile=256, col_tile=None):
    x = jnp.asarray(x, jnp.float32)
    adj = jnp.asarray(adj, jnp.float32)
    N, nfeat = x.shape
    H = params["fc0_w"].shape[1]
    nclass = params["fc1_w"].shape[1]
    conv_ws = params["conv_ws"]
    L = len(conv_ws)
    assert L >= 1

    LANE = 128
    csize = jnp.dtype(compute_dtype).itemsize
    SUB = max(8, 32 // csize)                 # sublane multiple for compute_dtype

    Hp = _round_up(H, LANE)
    nfeat_p = _round_up(nfeat, LANE)
    nclass_p = _round_up(nclass, LANE)

    # ---- row (M) tile ----
    base = LANE if row_tile >= LANE else SUB
    Np = _round_up(N, base)
    tm = min(_round_up(row_tile, SUB), Np)
    Np = _round_up(N, tm)

    # ---- per-generation VMEM budget (v7x: 64 MiB, v5e/v6e: 128 MiB) ----
    try:
        vmem_cap = int(pltpu.get_tpu_info().vmem_capacity_bytes)
    except Exception:
        vmem_cap = 64 * 1024 * 1024           # conservative (v7x-sized) fallback

    # ---- column (K / adj) tile: bound the streamed adj slab in VMEM ----
    if col_tile is None:
        budget = vmem_cap // 4
        if 2 * tm * Np * csize <= budget:
            tk = Np
        else:
            tk = max(LANE, (budget // (2 * tm * csize)) // LANE * LANE)
    else:
        tk = max(LANE, _round_up(col_tile, LANE))
    if tk >= Np:
        tk = Np
    else:
        Np = _round_up(N, (tm * tk) // math.gcd(tm, tk))   # tm and tk both divide Np
    n_tiles = Np // tm
    n_k = Np // tk
    adj_resident = (n_tiles == 1 and n_k == 1)

    # ---- pad operands.  Invariant: padded adj COLUMNS are zero, so the nonzero
    # h = relu(b0) on padded rows never leaks into real rows. ----
    xp = (jnp.zeros((Np, nfeat_p), jnp.float32)
          .at[:N, :nfeat].set(x).astype(compute_dtype))
    adjp = (jnp.zeros((Np, Np), jnp.float32)
            .at[:N, :N].set(adj).astype(compute_dtype))
    fc0w = (jnp.zeros((nfeat_p, Hp), jnp.float32)
            .at[:nfeat, :H].set(params["fc0_w"]).astype(compute_dtype))
    fc0b = jnp.zeros((1, Hp), jnp.float32).at[0, :H].set(params["fc0_b"])
    fc1w = (jnp.zeros((Hp, nclass_p), jnp.float32)
            .at[:H, :nclass].set(params["fc1_w"]).astype(compute_dtype))
    fc1b = jnp.zeros((1, nclass_p), jnp.float32).at[0, :nclass].set(params["fc1_b"])

    if variant:
        in_feat_p = 2 * Hp
        ws = []
        for w in conv_ws:                      # pad each concat-half separately
            wp = jnp.zeros((2 * Hp, Hp), jnp.float32)
            wp = wp.at[:H, :H].set(w[:H])
            wp = wp.at[Hp:Hp + H, :H].set(w[H:])
            ws.append(wp)
    else:
        in_feat_p = Hp
        ws = [jnp.zeros((Hp, Hp), jnp.float32).at[:H, :H].set(w) for w in conv_ws]
    conv_w = jnp.stack(ws, axis=0).astype(compute_dtype)    # [L, in_feat_p, Hp]

    thetas = jnp.array([min(1.0, math.log(lamda / (l + 1) + 1.0)) for l in range(L)],
                       jnp.float32)

    nsteps = L + 2
    kernel = functools.partial(
        _fused_kernel, nlayers=L, alpha=float(alpha), variant=bool(variant),
        hp=Hp, tm=tm, n_k=n_k, compute_dtype=compute_dtype)

    # x: only streamed at stage 0; afterwards pinned on its last block (no re-DMA).
    def x_map(t, i, k):
        return (jnp.where(t == 0, i, n_tiles - 1), 0)

    if adj_resident:
        # Whole adj lives in VMEM once, single-buffered (no 2x constant-index blocks).
        adj_spec = pl.BlockSpec(memory_space=pltpu.MemorySpace.VMEM)
    else:
        # Stream (tm, tk) adj blocks ONLY during layer stages; clamp on fc0/fc1 stages
        # so no block is re-fetched on stage transitions.
        def adj_map(t, i, k):
            on = jnp.logical_and(t >= 1, t <= L)
            ii = jnp.where(on, i, jnp.where(t == 0, 0, n_tiles - 1))
            kk = jnp.where(on, k, jnp.where(t == 0, 0, n_k - 1))
            return (ii, kk)
        adj_spec = pl.BlockSpec((tm, tk), adj_map)

    in_specs = [
        pl.BlockSpec(memory_space=pltpu.MemorySpace.SMEM),              # per-layer thetas
        pl.BlockSpec((tm, nfeat_p), x_map),                             # x
        adj_spec,                                                       # adj
        pl.BlockSpec((nfeat_p, Hp), lambda t, i, k: (0, 0)),            # fc0 W (pinned)
        pl.BlockSpec((1, Hp), lambda t, i, k: (0, 0)),                  # fc0 b
        pl.BlockSpec((1, in_feat_p, Hp),
                     lambda t, i, k: (jnp.clip(t - 1, 0, L - 1), 0, 0)),  # conv W / layer
        pl.BlockSpec((Hp, nclass_p), lambda t, i, k: (0, 0)),           # fc1 W (pinned)
        pl.BlockSpec((1, nclass_p), lambda t, i, k: (0, 0)),            # fc1 b
    ]
    # Output block index only advances at the final stage -> exactly one HBM writeback
    # per output block.
    out_specs = pl.BlockSpec((tm, nclass_p),
                             lambda t, i, k: (jnp.where(t == L + 1, i, 0), 0))

    scratch_shapes = [
        pltpu.VMEM((2, Np, Hp), compute_dtype),   # double-buffered layer-carried h
        pltpu.VMEM((Np, Hp), compute_dtype),      # h0 (output of fc0)
        pltpu.VMEM((tm, Hp), jnp.float32),        # f32 accumulator for adj @ h
    ]

    # ---- VMEM budget & cost estimate ----
    adj_vmem = Np * Np * csize if adj_resident else 2 * tm * tk * csize
    est = (2 * tm * nfeat_p * csize + adj_vmem
           + 2 * nfeat_p * Hp * csize + 2 * Hp * 4
           + 2 * in_feat_p * Hp * csize
           + 2 * Hp * nclass_p * csize + 2 * nclass_p * 4
           + 2 * tm * nclass_p * 4
           + 3 * Np * Hp * csize + tm * Hp * 4)
    vmem_limit = int(min(max(int(1.3 * est), 32 * 1024 * 1024),
                         int(0.9 * vmem_cap)))

    flops = (2 * Np * nfeat_p * Hp
             + L * (2 * Np * Np * Hp + 2 * Np * in_feat_p * Hp)
             + 2 * Np * Hp * nclass_p)
    adj_passes = 1 if adj_resident else L       # streamed adj is re-read every layer
    bytes_accessed = int(xp.size * csize + adjp.size * csize * adj_passes
                         + fc0w.size * csize + conv_w.size * csize
                         + fc1w.size * csize + (Hp + nclass_p) * 4
                         + Np * nclass_p * 4)

    out_p = pl.pallas_call(
        kernel,
        out_shape=jax.ShapeDtypeStruct((Np, nclass_p), jnp.float32),
        grid=(nsteps, n_tiles, n_k),
        in_specs=in_specs,
        out_specs=out_specs,
        scratch_shapes=scratch_shapes,
        compiler_params=pltpu.CompilerParams(
            dimension_semantics=("arbitrary", "arbitrary", "arbitrary"),
            vmem_limit_bytes=vmem_limit),
        cost_estimate=pl.CostEstimate(flops=int(flops), transcendentals=0,
                                      bytes_accessed=bytes_accessed),
    )(thetas, xp, adjp, fc0w, fc0b, conv_w, fc1w, fc1b)

    return out_p[:N, :nclass]


# ---------------------------------------------------------------------------
# Parameter init (matches the PyTorch module's shapes) + pure-JAX reference.
# ---------------------------------------------------------------------------
def init_params(key, nlayers, nfeat, nhidden, nclass, variant):
    keys = jax.random.split(key, 4 + nlayers)
    stdv_fc0 = 1.0 / math.sqrt(nfeat)
    stdv_fc1 = 1.0 / math.sqrt(nhidden)
    stdv_gc = 1.0 / math.sqrt(nhidden)
    in_feat_gc = 2 * nhidden if variant else nhidden
    return {
        "fc0_w": jax.random.uniform(keys[0], (nfeat, nhidden), jnp.float32,
                                    -stdv_fc0, stdv_fc0),
        "fc0_b": jax.random.uniform(keys[1], (nhidden,), jnp.float32,
                                    -stdv_fc0, stdv_fc0),
        "fc1_w": jax.random.uniform(keys[2], (nhidden, nclass), jnp.float32,
                                    -stdv_fc1, stdv_fc1),
        "fc1_b": jax.random.uniform(keys[3], (nclass,), jnp.float32,
                                    -stdv_fc1, stdv_fc1),
        "conv_ws": [
            jax.random.uniform(keys[4 + i], (in_feat_gc, nhidden), jnp.float32,
                               -stdv_gc, stdv_gc)
            for i in range(nlayers)
        ],
    }


def _reference_forward(params, x, adj, *, lamda, alpha, variant):
    x = x.astype(jnp.float32)
    h = jnp.maximum(x @ params["fc0_w"] + params["fc0_b"], 0.0)
    h0 = h
    H = h.shape[1]
    for i, w in enumerate(params["conv_ws"]):
        l = i + 1
        theta = min(1.0, math.log(lamda / l + 1.0))
        hi = adj @ h
        if variant:
            support = jnp.concatenate([hi, h0], axis=1)
            r = (1.0 - alpha) * hi + alpha * h0
        else:
            support = (1.0 - alpha) * hi + alpha * h0
            r = support
        out = theta * (support @ w) + (1.0 - theta) * r + h
        h = jnp.maximum(out, 0.0)
    return h @ params["fc1_w"] + params["fc1_b"]


if __name__ == "__main__":
    lamda, alpha = 0.5, 0.1
    key = jax.random.PRNGKey(0)
    k_x, k_adj, kp_a, k_x2, k_adj2, kp_b = jax.random.split(key, 6)

    # ---- Run A: small graph, f32, variant=False, adj resident in VMEM ----------
    nlayers, nfeat, nhidden, nclass, N = 2, 32, 32, 4, 16
    x = jax.random.normal(k_x, (N, nfeat), jnp.float32)
    adj_raw = jax.random.uniform(k_adj, (N, N), jnp.float32)
    adj = adj_raw / jnp.sum(adj_raw, axis=1, keepdims=True)   # row-normalized dense adj
    params_a = init_params(kp_a, nlayers, nfeat, nhidden, nclass, variant=False)
    out_a = graph_plbr_forward(params_a, x, adj, lamda=lamda, alpha=alpha,
                               variant=False, compute_dtype=jnp.float32,
                               row_tile=256)
    out_a = jax.block_until_ready(out_a)
    ref_a = _reference_forward(params_a, x, adj, lamda=lamda, alpha=alpha,
                               variant=False)
    assert out_a.shape == (N, nclass)
    assert jnp.allclose(out_a, ref_a, atol=1e-4, rtol=1e-4), \
        float(jnp.max(jnp.abs(out_a - ref_a)))

    # ---- Runs B/C: bigger graph, variant=True, streamed adj with row + K tiles --
    nlayers_b, nfeat_b, nhidden_b, nclass_b, Nb = 3, 32, 32, 4, 256
    xb = jax.random.normal(k_x2, (Nb, nfeat_b), jnp.float32)
    adjb_raw = jax.random.uniform(k_adj2, (Nb, Nb), jnp.float32)
    adjb = adjb_raw / jnp.sum(adjb_raw, axis=1, keepdims=True)
    params_b = init_params(kp_b, nlayers_b, nfeat_b, nhidden_b, nclass_b, variant=True)
    ref_b = _reference_forward(params_b, xb, adjb, lamda=lamda, alpha=alpha,
                               variant=True)

    # Run B: f32, exercises gated/streamed adj, K accumulation, variant math exactly.
    out_b = graph_plbr_forward(params_b, xb, adjb, lamda=lamda, alpha=alpha,
                               variant=True, compute_dtype=jnp.float32,
                               row_tile=128, col_tile=128)
    out_b = jax.block_until_ready(out_b)
    assert out_b.shape == (Nb, nclass_b)
    assert jnp.allclose(out_b, ref_b, atol=1e-4, rtol=1e-4), \
        float(jnp.max(jnp.abs(out_b - ref_b)))

    # Run C: bf16 MXU inputs + bf16 layer-carried scratch, f32 accumulation.
    out_c = graph_plbr_forward(params_b, xb, adjb, lamda=lamda, alpha=alpha,
                               variant=True, compute_dtype=jnp.bfloat16,
                               row_tile=128, col_tile=128)
    out_c = jax.block_until_ready(out_c)
    assert out_c.shape == (Nb, nclass_b)
    assert jnp.allclose(out_c, ref_b, atol=1.5e-1, rtol=1.5e-1), \
        float(jnp.max(jnp.abs(out_c - ref_b)))

    print("KERNEL_OK")
</pallas_src>

<mosaic_0001>
module attributes {stable_mosaic.version = 11 : i64} {
  func.func @_fused_kernel(%arg0: i32, %arg1: i32, %arg2: i32, %arg3: memref<2xf32, #tpu.memory_space<smem>>, %arg4: memref<128x128xf32, #tpu.memory_space<vmem>>, %arg5: memref<128x128xf32, #tpu.memory_space<vmem>>, %arg6: memref<128x128xf32, #tpu.memory_space<vmem>>, %arg7: memref<1x128xf32, #tpu.memory_space<vmem>>, %arg8: memref<1x128x128xf32, #tpu.memory_space<vmem>>, %arg9: memref<128x128xf32, #tpu.memory_space<vmem>>, %arg10: memref<1x128xf32, #tpu.memory_space<vmem>>, %arg11: memref<128x128xf32, #tpu.memory_space<vmem>>, %arg12: memref<2x128x128xf32, #tpu.memory_space<vmem>>, %arg13: memref<128x128xf32, #tpu.memory_space<vmem>>, %arg14: memref<128x128xf32, #tpu.memory_space<vmem>>) attributes {dimension_semantics = [#tpu.dimension_semantics<arbitrary>, #tpu.dimension_semantics<arbitrary>, #tpu.dimension_semantics<arbitrary>], iteration_bounds = array<i64: 4, 1, 1>, scalar_prefetch = 0 : i64, scratch_operands = 3 : i64, tpu.core_type = #tpu.core_type<tc>, window_params = [{transform_indices = @transform_0, window_bounds = array<i64: 2>}, {transform_indices = @transform_1, window_bounds = array<i64: 128, 128>}, {pipeline_mode = #tpu.pipeline_mode<synchronous>, transform_indices = @transform_2, window_bounds = array<i64: 128, 128>}, {pipeline_mode = #tpu.pipeline_mode<synchronous>, transform_indices = @transform_3, window_bounds = array<i64: 128, 128>}, {pipeline_mode = #tpu.pipeline_mode<synchronous>, transform_indices = @transform_4, window_bounds = array<i64: 1, 128>}, {transform_indices = @transform_5, window_bounds = array<i64: 1, 128, 128>}, {pipeline_mode = #tpu.pipeline_mode<synchronous>, transform_indices = @transform_6, window_bounds = array<i64: 128, 128>}, {pipeline_mode = #tpu.pipeline_mode<synchronous>, transform_indices = @transform_7, window_bounds = array<i64: 1, 128>}, {transform_indices = @transform_8, window_bounds = array<i64: 128, 128>}]} {
    %c128_i32 = arith.constant 128 : i32
    %0 = arith.muli %arg1, %c128_i32 : i32
    %1 = tpu.assume_multiple %0, 128 : i32
    %c128_i32_0 = arith.constant 128 : i32
    %2 = arith.muli %arg2, %c128_i32_0 : i32
    %3 = tpu.assume_multiple %2, 128 : i32
    %c1_i32 = arith.constant 1 : i32
    %4 = arith.cmpi sge, %arg0, %c1_i32 : i32
    %c2_i32 = arith.constant 2 : i32
    %5 = arith.cmpi sle, %arg0, %c2_i32 : i32
    %6 = arith.andi %4, %5 : i1
    %c0_i32 = arith.constant 0 : i32
    %7 = arith.cmpi eq, %arg0, %c0_i32 : i32
    %c0_i32_1 = arith.constant 0 : i32
    %8 = arith.cmpi eq, %arg2, %c0_i32_1 : i32
    %9 = arith.andi %7, %8 : i1
    %10 = arith.extui %9 : i1 to i32
    %c0_i32_2 = arith.constant 0 : i32
    %11 = arith.cmpi ne, %10, %c0_i32_2 : i32
    scf.if %11 {
      %c0 = arith.constant 0 : index
      %c0_10 = arith.constant 0 : index
      %27 = vector.load %arg4[%c0, %c0_10] : memref<128x128xf32, #tpu.memory_space<vmem>>, vector<128x128xf32>
      %c0_11 = arith.constant 0 : index
      %c0_12 = arith.constant 0 : index
      %28 = vector.load %arg6[%c0_11, %c0_12] : memref<128x128xf32, #tpu.memory_space<vmem>>, vector<128x128xf32>
      %cst = arith.constant dense<0.000000e+00> : vector<128x128xf32>
      %29 = tpu.matmul %27, %28, %cst {dimension_numbers = #tpu.dot_dimension_numbers<[1], [0], [0], [1], [0, 0, 1, 1], [], []>} : vector<128x128xf32>, vector<128x128xf32>, vector<128x128xf32> -> vector<128x128xf32>
      %c0_13 = arith.constant 0 : index
      %c0_14 = arith.constant 0 : index
      %30 = vector.load %arg7[%c0_13, %c0_14] : memref<1x128xf32, #tpu.memory_space<vmem>>, vector<1x128xf32>
      %31 = vector.broadcast %30 : vector<1x128xf32> to vector<128x128xf32>
      %32 = arith.addf %29, %31 : vector<128x128xf32>
      %cst_15 = arith.constant 0.000000e+00 : f32
      %33 = vector.broadcast %cst_15 : f32 to vector<128x128xf32>
      %34 = arith.maximumf %32, %33 : vector<128x128xf32>
      %c0_16 = arith.constant 0 : index
      %35 = arith.index_cast %1 : i32 to index
      %c0_17 = arith.constant 0 : index
      %36 = vector.load %arg12[%c0_16, %35, %c0_17] : memref<2x128x128xf32, #tpu.memory_space<vmem>>, vector<1x128x128xf32>
      %37 = vector.shape_cast %36 : vector<1x128x128xf32> to vector<128x128xf32>
      %38 = vector.shape_cast %34 : vector<128x128xf32> to vector<1x128x128xf32>
      tpu.vector_store %arg12[%c0_16, %35, %c0_17], %38 {strides = array<i32>} : memref<2x128x128xf32, #tpu.memory_space<vmem>>, vector<1x128x128xf32>,
      %39 = arith.index_cast %1 : i32 to index
      %c0_18 = arith.constant 0 : index
      %40 = vector.load %arg13[%39, %c0_18] : memref<128x128xf32, #tpu.memory_space<vmem>>, vector<128x128xf32>
      tpu.vector_store %arg13[%39, %c0_18], %34 {strides = array<i32>} : memref<128x128xf32, #tpu.memory_space<vmem>>, vector<128x128xf32>,
    } else {
    }
    %c0_i32_3 = arith.constant 0 : i32
    %12 = arith.cmpi eq, %arg2, %c0_i32_3 : i32
    %13 = arith.andi %6, %12 : i1
    %14 = arith.extui %13 : i1 to i32
    %c0_i32_4 = arith.constant 0 : i32
    %15 = arith.cmpi ne, %14, %c0_i32_4 : i32
    scf.if %15 {
      %cst = arith.constant 0.000000e+00 : f32
      %27 = vector.broadcast %cst : f32 to vector<128x128xf32>
      %c0 = arith.constant 0 : index
      %c0_10 = arith.constant 0 : index
      %28 = vector.load %arg14[%c0, %c0_10] : memref<128x128xf32, #tpu.memory_space<vmem>>, vector<128x128xf32>
      tpu.vector_store %arg14[%c0, %c0_10], %27 {strides = array<i32>} : memref<128x128xf32, #tpu.memory_space<vmem>>, vector<128x128xf32>,
    } else {
    }
    %16 = arith.extui %6 : i1 to i32
    %c0_i32_5 = arith.constant 0 : i32
    %17 = arith.cmpi ne, %16, %c0_i32_5 : i32
    scf.if %17 {
      %c1_i32_10 = arith.constant 1 : i32
      %27 = arith.subi %arg0, %c1_i32_10 : i32
      %c2_i32_11 = arith.constant 2 : i32
      %c0_i32_12 = arith.constant 0 : i32
      %28 = arith.cmpi eq, %c2_i32_11, %c0_i32_12 : i32
      %c1_i32_13 = arith.constant 1 : i32
      %29 = arith.select %28, %c1_i32_13, %c2_i32_11 : i32
      %30 = arith.remsi %27, %29 : i32
      %c0_i32_14 = arith.constant 0 : i32
      %31 = arith.cmpi ne, %30, %c0_i32_14 : i32
      %c0_i32_15 = arith.constant 0 : i32
      %32 = arith.cmpi slt, %30, %c0_i32_15 : i32
      %c0_i32_16 = arith.constant 0 : i32
      %33 = arith.cmpi slt, %29, %c0_i32_16 : i32
      %34 = arith.xori %32, %33 : i1
      %35 = arith.andi %34, %31 : i1
      %36 = arith.addi %30, %29 : i32
      %37 = arith.select %35, %36, %30 : i32
      %38 = arith.index_cast %37 : i32 to index
      %39 = arith.index_cast %3 : i32 to index
      %c0 = arith.constant 0 : index
      %40 = vector.load %arg12[%38, %39, %c0] : memref<2x128x128xf32, #tpu.memory_space<vmem>>, vector<1x128x128xf32>
      %41 = vector.shape_cast %40 : vector<1x128x128xf32> to vector<128x128xf32>
      %c0_17 = arith.constant 0 : index
      %c0_18 = arith.constant 0 : index
      %42 = vector.load %arg14[%c0_17, %c0_18] : memref<128x128xf32, #tpu.memory_space<vmem>>, vector<128x128xf32>
      %c0_19 = arith.constant 0 : index
      %c0_20 = arith.constant 0 : index
      %43 = vector.load %arg5[%c0_19, %c0_20] : memref<128x128xf32, #tpu.memory_space<vmem>>, vector<128x128xf32>
      %cst = arith.constant dense<0.000000e+00> : vector<128x128xf32>
      %44 = tpu.matmul %43, %41, %cst {dimension_numbers = #tpu.dot_dimension_numbers<[1], [0], [0], [1], [0, 0, 1, 1], [], []>} : vector<128x128xf32>, vector<128x128xf32>, vector<128x128xf32> -> vector<128x128xf32>
      %45 = arith.addf %42, %44 : vector<128x128xf32>
      %c0_21 = arith.constant 0 : index
      %c0_22 = arith.constant 0 : index
      %46 = vector.load %arg14[%c0_21, %c0_22] : memref<128x128xf32, #tpu.memory_space<vmem>>, vector<128x128xf32>
      tpu.vector_store %arg14[%c0_21, %c0_22], %45 {strides = array<i32>} : memref<128x128xf32, #tpu.memory_space<vmem>>, vector<128x128xf32>,
    } else {
    }
    %c0_i32_6 = arith.constant 0 : i32
    %18 = arith.cmpi eq, %arg2, %c0_i32_6 : i32
    %19 = arith.andi %6, %18 : i1
    %20 = arith.extui %19 : i1 to i32
    %c0_i32_7 = arith.constant 0 : i32
    %21 = arith.cmpi ne, %20, %c0_i32_7 : i32
    scf.if %21 {
      %c1_i32_10 = arith.constant 1 : i32
      %27 = arith.subi %arg0, %c1_i32_10 : i32
      %c0_i32_11 = arith.constant 0 : i32
      %c1_i32_12 = arith.constant 1 : i32
      %28 = arith.maxsi %c0_i32_11, %27 : i32
      %29 = arith.minsi %c1_i32_12, %28 : i32
      %30 = arith.index_cast %29 : i32 to index
      %31 = memref.load %arg3[%30] : memref<2xf32, #tpu.memory_space<smem>>
      %c1_i32_13 = arith.constant 1 : i32
      %32 = arith.subi %arg0, %c1_i32_13 : i32
      %c2_i32_14 = arith.constant 2 : i32
      %c0_i32_15 = arith.constant 0 : i32
      %33 = arith.cmpi eq, %c2_i32_14, %c0_i32_15 : i32
      %c1_i32_16 = arith.constant 1 : i32
      %34 = arith.select %33, %c1_i32_16, %c2_i32_14 : i32
      %35 = arith.remsi %32, %34 : i32
      %c0_i32_17 = arith.constant 0 : i32
      %36 = arith.cmpi ne, %35, %c0_i32_17 : i32
      %c0_i32_18 = arith.constant 0 : i32
      %37 = arith.cmpi slt, %35, %c0_i32_18 : i32
      %c0_i32_19 = arith.constant 0 : i32
      %38 = arith.cmpi slt, %34, %c0_i32_19 : i32
      %39 = arith.xori %37, %38 : i1
      %40 = arith.andi %39, %36 : i1
      %41 = arith.addi %35, %34 : i32
      %42 = arith.select %40, %41, %35 : i32
      %c2_i32_20 = arith.constant 2 : i32
      %c0_i32_21 = arith.constant 0 : i32
      %43 = arith.cmpi eq, %c2_i32_20, %c0_i32_21 : i32
      %c1_i32_22 = arith.constant 1 : i32
      %44 = arith.select %43, %c1_i32_22, %c2_i32_20 : i32
      %45 = arith.remsi %arg0, %44 : i32
      %c0_i32_23 = arith.constant 0 : i32
      %46 = arith.cmpi ne, %45, %c0_i32_23 : i32
      %c0_i32_24 = arith.constant 0 : i32
      %47 = arith.cmpi slt, %45, %c0_i32_24 : i32
      %c0_i32_25 = arith.constant 0 : i32
      %48 = arith.cmpi slt, %44, %c0_i32_25 : i32
      %49 = arith.xori %47, %48 : i1
      %50 = arith.andi %49, %46 : i1
      %51 = arith.addi %45, %44 : i32
      %52 = arith.select %50, %51, %45 : i32
      %c0 = arith.constant 0 : index
      %c0_26 = arith.constant 0 : index
      %53 = vector.load %arg14[%c0, %c0_26] : memref<128x128xf32, #tpu.memory_space<vmem>>, vector<128x128xf32>
      %54 = arith.index_cast %42 : i32 to index
      %55 = arith.index_cast %1 : i32 to index
      %c0_27 = arith.constant 0 : index
      %56 = vector.load %arg12[%54, %55, %c0_27] : memref<2x128x128xf32, #tpu.memory_space<vmem>>, vector<1x128x128xf32>
      %57 = vector.shape_cast %56 : vector<1x128x128xf32> to vector<128x128xf32>
      %58 = arith.index_cast %1 : i32 to index
      %c0_28 = arith.constant 0 : index
      %59 = vector.load %arg13[%58, %c0_28] : memref<128x128xf32, #tpu.memory_space<vmem>>, vector<128x128xf32>
      %cst = arith.constant 0.899999976 : f32
      %60 = vector.broadcast %cst : f32 to vector<128x128xf32>
      %61 = arith.mulf %60, %53 : vector<128x128xf32>
      %cst_29 = arith.constant 1.000000e-01 : f32
      %62 = vector.broadcast %cst_29 : f32 to vector<128x128xf32>
      %63 = arith.mulf %62, %59 : vector<128x128xf32>
      %64 = arith.addf %61, %63 : vector<128x128xf32>
      %c0_30 = arith.constant 0 : index
      %c0_31 = arith.constant 0 : index
      %c0_32 = arith.constant 0 : index
      %65 = vector.load %arg8[%c0_30, %c0_31, %c0_32] : memref<1x128x128xf32, #tpu.memory_space<vmem>>, vector<1x128x128xf32>
      %66 = vector.shape_cast %65 : vector<1x128x128xf32> to vector<128x128xf32>
      %cst_33 = arith.constant dense<0.000000e+00> : vector<128x128xf32>
      %67 = tpu.matmul %64, %66, %cst_33 {dimension_numbers = #tpu.dot_dimension_numbers<[1], [0], [0], [1], [0, 0, 1, 1], [], []>} : vector<128x128xf32>, vector<128x128xf32>, vector<128x128xf32> -> vector<128x128xf32>
      %68 = vector.broadcast %31 : f32 to vector<128x128xf32>
      %69 = arith.mulf %68, %67 : vector<128x128xf32>
      %cst_34 = arith.constant 1.000000e+00 : f32
      %70 = arith.subf %cst_34, %31 : f32
      %71 = vector.broadcast %70 : f32 to vector<128x128xf32>
      %72 = arith.mulf %71, %64 : vector<128x128xf32>
      %73 = arith.addf %69, %72 : vector<128x128xf32>
      %74 = arith.addf %73, %57 : vector<128x128xf32>
      %cst_35 = arith.constant 0.000000e+00 : f32
      %75 = vector.broadcast %cst_35 : f32 to vector<128x128xf32>
      %76 = arith.maximumf %74, %75 : vector<128x128xf32>
      %77 = arith.index_cast %52 : i32 to index
      %78 = arith.index_cast %1 : i32 to index
      %c0_36 = arith.constant 0 : index
      %79 = vector.load %arg12[%77, %78, %c0_36] : memref<2x128x128xf32, #tpu.memory_space<vmem>>, vector<1x128x128xf32>
      %80 = vector.shape_cast %79 : vector<1x128x128xf32> to vector<128x128xf32>
      %81 = vector.shape_cast %76 : vector<128x128xf32> to vector<1x128x128xf32>
      tpu.vector_store %arg12[%77, %78, %c0_36], %81 {strides = array<i32>} : memref<2x128x128xf32, #tpu.memory_space<vmem>>, vector<1x128x128xf32>,
    } else {
    }
    %c3_i32 = arith.constant 3 : i32
    %22 = arith.cmpi eq, %arg0, %c3_i32 : i32
    %c0_i32_8 = arith.constant 0 : i32
    %23 = arith.cmpi eq, %arg2, %c0_i32_8 : i32
    %24 = arith.andi %22, %23 : i1
    %25 = arith.extui %24 : i1 to i32
    %c0_i32_9 = arith.constant 0 : i32
    %26 = arith.cmpi ne, %25, %c0_i32_9 : i32
    scf.if %26 {
      %c0 = arith.constant 0 : index
      %27 = arith.index_cast %1 : i32 to index
      %c0_10 = arith.constant 0 : index
      %28 = vector.load %arg12[%c0, %27, %c0_10] : memref<2x128x128xf32, #tpu.memory_space<vmem>>, vector<1x128x128xf32>
      %29 = vector.shape_cast %28 : vector<1x128x128xf32> to vector<128x128xf32>
      %c0_11 = arith.constant 0 : index
      %c0_12 = arith.constant 0 : index
      %30 = vector.load %arg9[%c0_11, %c0_12] : memref<128x128xf32, #tpu.memory_space<vmem>>, vector<128x128xf32>
      %cst = arith.constant dense<0.000000e+00> : vector<128x128xf32>
      %31 = tpu.matmul %29, %30, %cst {dimension_numbers = #tpu.dot_dimension_numbers<[1], [0], [0], [1], [0, 0, 1, 1], [], []>} : vector<128x128xf32>, vector<128x128xf32>, vector<128x128xf32> -> vector<128x128xf32>
      %c0_13 = arith.constant 0 : index
      %c0_14 = arith.constant 0 : index
      %32 = vector.load %arg10[%c0_13, %c0_14] : memref<1x128xf32, #tpu.memory_space<vmem>>, vector<1x128xf32>
      %33 = vector.broadcast %32 : vector<1x128xf32> to vector<128x128xf32>
      %34 = arith.addf %31, %33 : vector<128x128xf32>
      %c0_15 = arith.constant 0 : index
      %c0_16 = arith.constant 0 : index
      %35 = vector.load %arg11[%c0_15, %c0_16] : memref<128x128xf32, #tpu.memory_space<vmem>>, vector<128x128xf32>
      tpu.vector_store %arg11[%c0_15, %c0_16], %34 {strides = array<i32>} : memref<128x128xf32, #tpu.memory_space<vmem>>, vector<128x128xf32>,
    } else {
    }
    return
  }
  func.func @transform_0(%arg0: i32, %arg1: i32, %arg2: i32) -> i32 {
    %c0_i32 = arith.constant 0 : i32
    %c0_i32_0 = arith.constant 0 : i32
    return %c0_i32 : i32
  }
  func.func @transform_1(%arg0: i32, %arg1: i32, %arg2: i32) -> (i32, i32) {
    %c0_i32 = arith.constant 0 : i32
    %0 = arith.cmpi eq, %arg0, %c0_i32 : i32
    %c0_i32_0 = arith.constant 0 : i32
    %1 = arith.select %0, %arg1, %c0_i32_0 : i32
    %c0_i32_1 = arith.constant 0 : i32
    %c0_i32_2 = arith.constant 0 : i32
    return %1, %c0_i32_1 : i32, i32
  }
  func.func @transform_2(%arg0: i32, %arg1: i32, %arg2: i32) -> (i32, i32) {
    %c0_i32 = arith.constant 0 : i32
    %c0_i32_0 = arith.constant 0 : i32
    %c0_i32_1 = arith.constant 0 : i32
    return %c0_i32, %c0_i32_0 : i32, i32
  }
  func.func @transform_3(%arg0: i32, %arg1: i32, %arg2: i32) -> (i32, i32) {
    %c0_i32 = arith.constant 0 : i32
    %c0_i32_0 = arith.constant 0 : i32
    %c0_i32_1 = arith.constant 0 : i32
    return %c0_i32, %c0_i32_0 : i32, i32
  }
  func.func @transform_4(%arg0: i32, %arg1: i32, %arg2: i32) -> (i32, i32) {
    %c0_i32 = arith.constant 0 : i32
    %c0_i32_0 = arith.constant 0 : i32
    %c0_i32_1 = arith.constant 0 : i32
    return %c0_i32, %c0_i32_0 : i32, i32
  }
  func.func @transform_5(%arg0: i32, %arg1: i32, %arg2: i32) -> (i32, i32, i32) {
    %c1_i32 = arith.constant 1 : i32
    %0 = arith.subi %arg0, %c1_i32 : i32
    %c0_i32 = arith.constant 0 : i32
    %c1_i32_0 = arith.constant 1 : i32
    %1 = arith.maxsi %c0_i32, %0 : i32
    %2 = arith.minsi %c1_i32_0, %1 : i32
    %c0_i32_1 = arith.constant 0 : i32
    %c0_i32_2 = arith.constant 0 : i32
    %c0_i32_3 = arith.constant 0 : i32
    return %2, %c0_i32_1, %c0_i32_2 : i32, i32, i32
  }
  func.func @transform_6(%arg0: i32, %arg1: i32, %arg2: i32) -> (i32, i32) {
    %c0_i32 = arith.constant 0 : i32
    %c0_i32_0 = arith.constant 0 : i32
    %c0_i32_1 = arith.constant 0 : i32
    return %c0_i32, %c0_i32_0 : i32, i32
  }
  func.func @transform_7(%arg0: i32, %arg1: i32, %arg2: i32) -> (i32, i32) {
    %c0_i32 = arith.constant 0 : i32
    %c0_i32_0 = arith.constant 0 : i32
    %c0_i32_1 = arith.constant 0 : i32
    return %c0_i32, %c0_i32_0 : i32, i32
  }
  func.func @transform_8(%arg0: i32, %arg1: i32, %arg2: i32) -> (i32, i32) {
    %c3_i32 = arith.constant 3 : i32
    %0 = arith.cmpi eq, %arg0, %c3_i32 : i32
    %c0_i32 = arith.constant 0 : i32
    %1 = arith.select %0, %arg1, %c0_i32 : i32
    %c0_i32_0 = arith.constant 0 : i32
    %c0_i32_1 = arith.constant 0 : i32
    return %1, %c0_i32_0 : i32, i32
  }
}

</mosaic_0001>

<llo_original>
// kernel: tpu_custom_call.1
$region0: #{tpu_custom_call.1}
  #allocation0 [shape = 'u32[]', space=smem, size = 0x4, offset = 0x4, fixed_abs, tag = 'smem constant byte address 0x4 - core index']
  #allocation1 [shape = 'u32[144,128]{1,0:T(1,128)}', space=vmem, size = 0x12000, scoped, tag = 'internal scratch']
  #allocation2 [shape = 'f32[2,128,128]{2,1,0:T(8,128)}', space=vmem, size = 0x20000, scoped, tag = 'scratch operand']
  #allocation3 [shape = 'f32[128,128]{1,0:T(8,128)}', space=vmem, size = 0x10000, scoped, tag = 'scratch operand']
  #allocation4 [shape = 'f32[128,128]{1,0:T(8,128)}', space=vmem, size = 0x10000, scoped, tag = 'scratch operand']
  %s0 = inlined_call_operand.hbm [shape: f32[2], index: 0, kind: input, shape index: {}]
  %s1 = inlined_call_operand.hbm [shape: f32[128,128], index: 1, kind: input, shape index: {}]
  %s2 = inlined_call_operand.hbm [shape: f32[128,128], index: 2, kind: input, shape index: {}]
  %s3 = inlined_call_operand.hbm [shape: f32[128,128], index: 3, kind: input, shape index: {}]
  %s4 = inlined_call_operand.vmem [shape: f32[1,128], index: 4, kind: input, shape index: {}]
  %s5 = inlined_call_operand.hbm [shape: f32[2,128,128], index: 5, kind: input, shape index: {}]
  %s6 = inlined_call_operand.hbm [shape: f32[128,128], index: 6, kind: input, shape index: {}]
  %s7 = inlined_call_operand.vmem [shape: f32[1,128], index: 7, kind: input, shape index: {}]
  %s8 = inlined_call_operand.hbm [shape: f32[128,128], index: 8, kind: output, shape index: {}]
  %s9 = sld [smem:[#allocation0]]
  $region109: #{tpu_custom_call.1} parent=0
    _
  %s11 = ssub.s32 1, %s9
  %s12 = scalar_select 0, %s11, %s9
  $region1: #{tpu_custom_call.1} parent=0
    #allocation5 [shape = 'u8[512]{0}', space=smem, size = 0x200, scoped, tag = 'input window, operand 0, single buffered']
    #allocation6 [shape = 's32[2]{0}', space=sflag, size = 0x8, scoped, tag = 'scoped memory for tpu_custom_call.1']
    #allocation7 [shape = 's32[2]{0}', space=sflag, size = 0x8, scoped, tag = 'scoped memory for tpu_custom_call.1']
    #allocation8 [shape = 's32[2]{0}', space=sflag, size = 0x8, scoped, tag = 'scoped memory for tpu_custom_call.1']
    #allocation9 [shape = 'u8[131072]{0}', space=vmem, size = 0x20000, scoped, tag = 'input window, operand 1']
    #allocation10 [shape = 'u8[65536]{0}', space=vmem, size = 0x10000, scoped, tag = 'input window, operand 2, single buffered']
    #allocation11 [shape = 's32[1]{0}', space=sflag, size = 0x4, scoped, tag = 'scoped memory for tpu_custom_call.1']
    #allocation12 [shape = 'u8[65536]{0}', space=vmem, size = 0x10000, scoped, tag = 'input window, operand 3, single buffered']
    #allocation13 [shape = 'u8[131072]{0}', space=vmem, size = 0x20000, scoped, tag = 'input window, operand 5']
    #allocation14 [shape = 's32[2]{0}', space=sflag, size = 0x8, scoped, tag = 'scoped memory for tpu_custom_call.1']
    #allocation15 [shape = 'u8[65536]{0}', space=vmem, size = 0x10000, scoped, tag = 'input window, operand 6, single buffered']
    #allocation16 [shape = 'u8[131072]{0}', space=vmem, size = 0x20000, scoped, tag = 'output window, operand 0']
    %13 = vsyncpa [#allocation8], 0
    %14 = vsyncpa [#allocation6], 0
    %s15 = scalar_lea.sflag [#allocation6], 1
    %16 = vsyncpa %s15, 0
    %17 = vsyncpa [#allocation11], 0
    %18 = vsyncpa [#allocation14], 0
    %s19 = scalar_lea.sflag [#allocation14], 1
    %20 = vsyncpa %s19, 0
    %21 = vsyncpa [#allocation7], 0
    %s22 = scalar_lea.sflag [#allocation7], 1
    %23 = vsyncpa %s22, 0
    loop: start=0, step=1, limit=6
    $region2: #{tpu_custom_call.1} parent=1 // loop_pre_header
      _
    $region3: #{tpu_custom_call.1} parent=1 // loop_header
      %s25 = sphi 0, %s29
      %p26 = scmp.ge.s32.totalorder %s25, 6
      %s32 = sphi 0, %s51
      %s33 = sphi 0, %s47
      %s34 = sphi 0, %s43
      %s35 = sphi 0, %s32
      %s36 = sphi 0, %s33
      %s37 = sphi 0, %s34
      %s38 = sphi 0, %s35
      %s39 = sphi 0, %s36
      %s40 = sphi 0, %s37
      %s52 = sphi 0, %s52
      %s54 = sphi 0, %s52
      %s55 = sphi 0, %s54
      %s69 = sphi 0, %s55
      %s79 = sphi 0, %s81
      %s82 = sphi 0, %s79
      %s83 = sphi 0, %s82
      %s99 = sphi 0, %s83
      %s103 = sphi 0, %s103
      %s105 = sphi 0, %s103
      %s106 = sphi 0, %s105
      %s120 = sphi 0, %s106
      %s124 = sphi 0, %s124
      %s126 = sphi 0, %s124
      %s127 = sphi 0, %s126
      %s141 = sphi 0, %s127
      %s145 = sphi 0, %s145
      %s147 = sphi 0, %s145
      %s148 = sphi 0, %s147
      %s162 = sphi 0, %s148
      %s178 = sphi 0, %s180
      %s181 = sphi 0, %s178
      %s182 = sphi 0, %s181
      %s198 = sphi 0, %s182
      %s202 = sphi 0, %s202
      %s204 = sphi 0, %s202
      %s205 = sphi 0, %s204
      %s219 = sphi 0, %s205
      %s223 = sphi 0, %s223
      %s225 = sphi 0, %s223
      %s226 = sphi 0, %s225
      %s240 = sphi 0, %s226
      %s250 = sphi 0, %s252
      %s253 = sphi 0, %s250
      %s254 = sphi 0, %s253
      %s270 = sphi 0, %s254
    $region4: #{tpu_custom_call.1} parent=1 // loop_header_branch
      %28 = sbr.rel (%p26) target = $region8
    $region5: #{tpu_custom_call.1} parent=1 // loop_body
      %s30 = ssub.s32 %s25, 1
      %s31 = ssub.s32 %s25, 2
      %s41 = sadd.s32 1, %s34
      %p42 = scmp.ge.s32.totalorder %s41, 1
      %s43 = scalar_select %p42, 0, %s41
      %s44 = sadd.s32 1, %s33
      %s45 = scalar_select %p42, %s44, %s33
      %p46 = scmp.ge.s32.totalorder %s45, 1
      %s47 = scalar_select %p46, 0, %s45
      %s48 = sadd.s32 1, %s32
      %s49 = scalar_select %p46, %s48, %s32
      %p50 = scmp.ge.s32.totalorder %s49, 4
      %s51 = scalar_select %p50, 0, %s49
      %s53 = sadd.s32 %s52, 1
      %p56 = scmp.eq.s32.totalorder %s25, 3
      %p57 = scmp.ne.s32.totalorder %s52, %s54
      %p58 = scmp.eq.s32.totalorder %s25, 0
      %p59 = por %p57, %p58
      %p60 = scmp.ne.s32.totalorder %s52, %s54
      %p61 = scmp.eq.s32.totalorder %s30, 3
      %p62 = por %p60, %p61
      %p63 = scmp.ne.s32.totalorder %s54, %s55
      %p64 = scmp.eq.s32.totalorder %s30, 0
      %p65 = por %p63, %p64
      %p66 = scmp.ne.s32.totalorder %s54, %s55
      %p67 = scmp.eq.s32.totalorder %s31, 3
      %p68 = por %p66, %p67
      %p70 = scmp.ne.s32.totalorder %s55, %s69
      %p71 = scmp.eq.s32.totalorder %s31, 0
      %p72 = por %p70, %p71
      %p73 = scmp.eq.s32.totalorder %s32, 0
      %s74 = scalar_select %p73, %s33, 0
      %p75 = scmp.eq.s32.totalorder %s51, 0
      %s76 = scalar_select %p75, %s47, 0
      %s77 = ssub.s32 %s74, %s76
      %p78 = scmp.eq.s32.totalorder %s77, 0
      %s80 = sadd.s32 %s79, 1
      %s81 = scalar_select %p78, %s79, %s80
      %p84 = pneg %p78
      %p85 = scmp.eq.s32.totalorder %s25, 3
      %p86 = por %p84, %p85
      %p87 = scmp.ne.s32.totalorder %s79, %s82
      %p88 = scmp.eq.s32.totalorder %s25, 0
      %p89 = por %p87, %p88
      %p90 = scmp.ne.s32.totalorder %s79, %s82
      %p91 = scmp.eq.s32.totalorder %s30, 3
      %p92 = por %p90, %p91
      %p93 = scmp.ne.s32.totalorder %s82, %s83
      %p94 = scmp.eq.s32.totalorder %s30, 0
      %p95 = por %p93, %p94
      %p96 = scmp.ne.s32.totalorder %s82, %s83
      %p97 = scmp.eq.s32.totalorder %s31, 3
      %p98 = por %p96, %p97
      %p100 = scmp.ne.s32.totalorder %s83, %s99
      %p101 = scmp.eq.s32.totalorder %s31, 0
      %p102 = por %p100, %p101
      %s104 = sadd.s32 %s103, 1
      %p107 = scmp.eq.s32.totalorder %s25, 3
      %p108 = scmp.ne.s32.totalorder %s103, %s105
      %p109 = scmp.eq.s32.totalorder %s25, 0
      %p110 = por %p108, %p109
      %p111 = scmp.ne.s32.totalorder %s103, %s105
      %p112 = scmp.eq.s32.totalorder %s30, 3
      %p113 = por %p111, %p112
      %p114 = scmp.ne.s32.totalorder %s105, %s106
      %p115 = scmp.eq.s32.totalorder %s30, 0
      %p116 = por %p114, %p115
      %p117 = scmp.ne.s32.totalorder %s105, %s106
      %p118 = scmp.eq.s32.totalorder %s31, 3
      %p119 = por %p117, %p118
      %p121 = scmp.ne.s32.totalorder %s106, %s120
      %p122 = scmp.eq.s32.totalorder %s31, 0
      %p123 = por %p121, %p122
      %s125 = sadd.s32 %s124, 1
      %p128 = scmp.eq.s32.totalorder %s25, 3
      %p129 = scmp.ne.s32.totalorder %s124, %s126
      %p130 = scmp.eq.s32.totalorder %s25, 0
      %p131 = por %p129, %p130
      %p132 = scmp.ne.s32.totalorder %s124, %s126
      %p133 = scmp.eq.s32.totalorder %s30, 3
      %p134 = por %p132, %p133
      %p135 = scmp.ne.s32.totalorder %s126, %s127
      %p136 = scmp.eq.s32.totalorder %s30, 0
      %p137 = por %p135, %p136
      %p138 = scmp.ne.s32.totalorder %s126, %s127
      %p139 = scmp.eq.s32.totalorder %s31, 3
      %p140 = por %p138, %p139
      %p142 = scmp.ne.s32.totalorder %s127, %s141
      %p143 = scmp.eq.s32.totalorder %s31, 0
      %p144 = por %p142, %p143
      %s146 = sadd.s32 %s145, 1
      %p149 = scmp.eq.s32.totalorder %s25, 3
      %p150 = scmp.ne.s32.totalorder %s145, %s147
      %p151 = scmp.eq.s32.totalorder %s25, 0
      %p152 = por %p150, %p151
      %p153 = scmp.ne.s32.totalorder %s145, %s147
      %p154 = scmp.eq.s32.totalorder %s30, 3
      %p155 = por %p153, %p154
      %p156 = scmp.ne.s32.totalorder %s147, %s148
      %p157 = scmp.eq.s32.totalorder %s30, 0
      %p158 = por %p156, %p157
      %p159 = scmp.ne.s32.totalorder %s147, %s148
      %p160 = scmp.eq.s32.totalorder %s31, 3
      %p161 = por %p159, %p160
      %p163 = scmp.ne.s32.totalorder %s148, %s162
      %p164 = scmp.eq.s32.totalorder %s31, 0
      %p165 = por %p163, %p164
      %s166 = ssub.s32 %s32, 1
      %p167 = scmp.gt.s32.totalorder %s166, 0
      %s168 = scalar_select %p167, %s166, 0
      %p169 = scmp.lt.s32.totalorder %s168, 1
      %s170 = scalar_select %p169, %s168, 1
      %s171 = ssub.s32 %s51, 1
      %p172 = scmp.gt.s32.totalorder %s171, 0
      %s173 = scalar_select %p172, %s171, 0
      %p174 = scmp.lt.s32.totalorder %s173, 1
      %s175 = scalar_select %p174, %s173, 1
      %s176 = ssub.s32 %s170, %s175
      %p177 = scmp.eq.s32.totalorder %s176, 0
      %s179 = sadd.s32 %s178, 1
      %s180 = scalar_select %p177, %s178, %s179
      %p183 = pneg %p177
      %p184 = scmp.eq.s32.totalorder %s25, 3
      %p185 = por %p183, %p184
      %p186 = scmp.ne.s32.totalorder %s178, %s181
      %p187 = scmp.eq.s32.totalorder %s25, 0
      %p188 = por %p186, %p187
      %p189 = scmp.ne.s32.totalorder %s178, %s181
      %p190 = scmp.eq.s32.totalorder %s30, 3
      %p191 = por %p189, %p190
      %p192 = scmp.ne.s32.totalorder %s181, %s182
      %p193 = scmp.eq.s32.totalorder %s30, 0
      %p194 = por %p192, %p193
      %p195 = scmp.ne.s32.totalorder %s181, %s182
      %p196 = scmp.eq.s32.totalorder %s31, 3
      %p197 = por %p195, %p196
      %p199 = scmp.ne.s32.totalorder %s182, %s198
      %p200 = scmp.eq.s32.totalorder %s31, 0
      %p201 = por %p199, %p200
      %s203 = sadd.s32 %s202, 1
      %p206 = scmp.eq.s32.totalorder %s25, 3
      %p207 = scmp.ne.s32.totalorder %s202, %s204
      %p208 = scmp.eq.s32.totalorder %s25, 0
      %p209 = por %p207, %p208
      %p210 = scmp.ne.s32.totalorder %s202, %s204
      %p211 = scmp.eq.s32.totalorder %s30, 3
      %p212 = por %p210, %p211
      %p213 = scmp.ne.s32.totalorder %s204, %s205
      %p214 = scmp.eq.s32.totalorder %s30, 0
      %p215 = por %p213, %p214
      %p216 = scmp.ne.s32.totalorder %s204, %s205
      %p217 = scmp.eq.s32.totalorder %s31, 3
      %p218 = por %p216, %p217
      %p220 = scmp.ne.s32.totalorder %s205, %s219
      %p221 = scmp.eq.s32.totalorder %s31, 0
      %p222 = por %p220, %p221
      %s224 = sadd.s32 %s223, 1
      %p227 = scmp.eq.s32.totalorder %s25, 3
      %p228 = scmp.ne.s32.totalorder %s223, %s225
      %p229 = scmp.eq.s32.totalorder %s25, 0
      %p230 = por %p228, %p229
      %p231 = scmp.ne.s32.totalorder %s223, %s225
      %p232 = scmp.eq.s32.totalorder %s30, 3
      %p233 = por %p231, %p232
      %p234 = scmp.ne.s32.totalorder %s225, %s226
      %p235 = scmp.eq.s32.totalorder %s30, 0
      %p236 = por %p234, %p235
      %p237 = scmp.ne.s32.totalorder %s225, %s226
      %p238 = scmp.eq.s32.totalorder %s31, 3
      %p239 = por %p237, %p238
      %p241 = scmp.ne.s32.totalorder %s226, %s240
      %p242 = scmp.eq.s32.totalorder %s31, 0
      %p243 = por %p241, %p242
      %p244 = scmp.eq.s32.totalorder %s32, 3
      %s245 = scalar_select %p244, %s33, 0
      %p246 = scmp.eq.s32.totalorder %s51, 3
      %s247 = scalar_select %p246, %s47, 0
      %s248 = ssub.s32 %s245, %s247
      %p249 = scmp.eq.s32.totalorder %s248, 0
      %s251 = sadd.s32 %s250, 1
      %s252 = scalar_select %p249, %s250, %s251
      %p255 = pneg %p249
      %p256 = scmp.eq.s32.totalorder %s25, 3
      %p257 = por %p255, %p256
      %p258 = scmp.ne.s32.totalorder %s250, %s253
      %p259 = scmp.eq.s32.totalorder %s25, 0
      %p260 = por %p258, %p259
      %p261 = scmp.ne.s32.totalorder %s250, %s253
      %p262 = scmp.eq.s32.totalorder %s30, 3
      %p263 = por %p261, %p262
      %p264 = scmp.ne.s32.totalorder %s253, %s254
      %p265 = scmp.eq.s32.totalorder %s30, 0
      %p266 = por %p264, %p265
      %p267 = scmp.ne.s32.totalorder %s253, %s254
      %p268 = scmp.eq.s32.totalorder %s31, 3
      %p269 = por %p267, %p268
      %p271 = scmp.ne.s32.totalorder %s254, %s270
      %p272 = scmp.eq.s32.totalorder %s31, 0
      %p273 = por %p271, %p272
      %p274 = scmp.le.s32.totalorder 1, %s25
      %p275 = scmp.lt.s32.totalorder %s25, 5
      %p276 = pnand %p274, %p275
      %p277 = pneg %p276
      // Predicated region
      $region9: #{tpu_custom_call.1} parent=5 // pred_check
        _
      $region10: #{tpu_custom_call.1} parent=5 // pred_check_branch
        %279 = sbr.rel (%p276) target = $region12
      $region11: #{tpu_custom_call.1} parent=5 // pred_region
        %s280 = ssub.s32 %s25, 1
        // Predicated region
        $region13: #{tpu_custom_call.1} parent=11 // pred_check
          %p281 = pneg %p65
        $region14: #{tpu_custom_call.1} parent=11 // pred_check_branch
          %283 = sbr.rel (%p281) target = $region16
        $region15: #{tpu_custom_call.1} parent=11 // pred_region
          %s285 = ssub.s32 16, 16
          %286 = vsyncadd [#allocation8], %s285
          %289 = dma.hbm_to_smem %s0, 16, [#allocation5], [#allocation8]
        $region16: #{tpu_custom_call.1} parent=11 // pred_fallthru
          _
        // Predicated region
        $region17: #{tpu_custom_call.1} parent=11 // pred_check
          %p290 = pneg %p116
        $region18: #{tpu_custom_call.1} parent=11 // pred_check_branch
          %292 = sbr.rel (%p290) target = $region20
        $region19: #{tpu_custom_call.1} parent=11 // pred_region
          %s294 = ssub.s32 2048, 2048
          %295 = vsyncadd [#allocation11], %s294
          %s296 = sshll.u32 [#allocation10], 4
          %s297 = int_to_ptr.vmem [resolvable:$true] %s296
          %302 = dma.hbm_to_vmem [thread:$0]  %s2, 2048, %s297, [#allocation11], 128, 128, 8
        $region20: #{tpu_custom_call.1} parent=11 // pred_fallthru
          _
        // Predicated region
        $region21: #{tpu_custom_call.1} parent=11 // pred_check
          %p303 = pneg %p137
        $region22: #{tpu_custom_call.1} parent=11 // pred_check_branch
          %305 = sbr.rel (%p303) target = $region24
        $region23: #{tpu_custom_call.1} parent=11 // pred_region
          %s307 = ssub.s32 2048, 2048
          %308 = vsyncadd [#allocation11], %s307
          %s309 = sshll.u32 [#allocation12], 4
          %s310 = int_to_ptr.vmem [resolvable:$true] %s309
          %315 = dma.hbm_to_vmem [thread:$0]  %s3, 2048, %s310, [#allocation11], 128, 128, 8
        $region24: #{tpu_custom_call.1} parent=11 // pred_fallthru
          _
        // Predicated region
        $region25: #{tpu_custom_call.1} parent=11 // pred_check
          %p316 = pneg %p158
        $region26: #{tpu_custom_call.1} parent=11 // pred_check_branch
          %318 = sbr.rel (%p316) target = $region28
        $region27: #{tpu_custom_call.1} parent=11 // pred_region
          _
        $region28: #{tpu_custom_call.1} parent=11 // pred_fallthru
          _
        // Predicated region
        $region29: #{tpu_custom_call.1} parent=11 // pred_check
          %p319 = pneg %p215
        $region30: #{tpu_custom_call.1} parent=11 // pred_check_branch
          %321 = sbr.rel (%p319) target = $region32
        $region31: #{tpu_custom_call.1} parent=11 // pred_region
          %s323 = ssub.s32 2048, 2048
          %324 = vsyncadd [#allocation14], %s323
          %s325 = sshll.u32 [#allocation15], 4
          %s326 = int_to_ptr.vmem [resolvable:$true] %s325
          %331 = dma.hbm_to_vmem [thread:$0]  %s6, 2048, %s326, [#allocation14], 128, 128, 8
        $region32: #{tpu_custom_call.1} parent=11 // pred_fallthru
          _
        // Predicated region
        $region33: #{tpu_custom_call.1} parent=11 // pred_check
          %p332 = pneg %p236
        $region34: #{tpu_custom_call.1} parent=11 // pred_check_branch
          %334 = sbr.rel (%p332) target = $region36
        $region35: #{tpu_custom_call.1} parent=11 // pred_region
          _
        $region36: #{tpu_custom_call.1} parent=11 // pred_fallthru
          _
      $region12: #{tpu_custom_call.1} parent=5 // pred_fallthru
        _
      %p335 = scmp.lt.s32.totalorder %s25, 4
      // Predicated region
      $region37: #{tpu_custom_call.1} parent=5 // pred_check
        %p336 = pneg %p335
      $region38: #{tpu_custom_call.1} parent=5 // pred_check_branch
        %338 = sbr.rel (%p336) target = $region40
      $region39: #{tpu_custom_call.1} parent=5 // pred_region
        // Predicated region
        $region41: #{tpu_custom_call.1} parent=39 // pred_check
          %p339 = pneg %p89
        $region42: #{tpu_custom_call.1} parent=39 // pred_check_branch
          %341 = sbr.rel (%p339) target = $region44
        $region43: #{tpu_custom_call.1} parent=39 // pred_region
          %s342 = sand.u32 %s79, 1
          %s343 = scalar_lea.sflag [#allocation6], %s342
          %s344 = sand.u32 %s79, 1
          %s345 = smul.addr %s344, 128
          %s346 = scalar_lea.vmem [#allocation9], %s345
          %p347 = scmp.eq.s32.totalorder %s32, 0
          %s348 = scalar_select %p347, %s33, 0
          %s349 = smul.u32 16, %s348
          %s351 = ssub.s32 2048, 2048
          %352 = vsyncadd %s343, %s351
          %s353 = smul.addr %s349, 128
          %s354 = scalar_lea.hbm %s1, %s353
          %s355 = sshll.u32 %s346, 4
          %s356 = int_to_ptr.vmem [resolvable:$true] %s355
          %361 = dma.hbm_to_vmem [thread:$0]  %s354, 2048, %s356, %s343, 128, 128, 8
        $region44: #{tpu_custom_call.1} parent=39 // pred_fallthru
          _
        // Predicated region
        $region45: #{tpu_custom_call.1} parent=39 // pred_check
          %p362 = pneg %p188
        $region46: #{tpu_custom_call.1} parent=39 // pred_check_branch
          %364 = sbr.rel (%p362) target = $region48
        $region47: #{tpu_custom_call.1} parent=39 // pred_region
          %s365 = sand.u32 %s25, 1
          %s366 = scalar_lea.sflag [#allocation14], %s365
          %s367 = sand.u32 %s178, 1
          %s368 = smul.addr %s367, 128
          %s369 = scalar_lea.vmem [#allocation13], %s368
          %s370 = ssub.s32 %s32, 1
          %p371 = scmp.gt.s32.totalorder %s370, 0
          %s372 = scalar_select %p371, %s370, 0
          %p373 = scmp.lt.s32.totalorder %s372, 1
          %s374 = scalar_select %p373, %s372, 1
          %s376 = ssub.s32 2048, 2048
          %377 = vsyncadd %s366, %s376
          %s378 = smul.addr %s374, 16
          %s379 = smul.addr %s378, 128
          %s380 = scalar_lea.hbm %s5, %s379
          %s381 = sshll.u32 %s369, 4
          %s382 = int_to_ptr.vmem [resolvable:$true] %s381
          %387 = dma.hbm_to_vmem [thread:$0]  %s380, 2048, %s382, %s366, 128, 128, 8
        $region48: #{tpu_custom_call.1} parent=39 // pred_fallthru
          _
      $region40: #{tpu_custom_call.1} parent=5 // pred_fallthru
        _
      %p388 = scmp.le.s32.totalorder 1, %s25
      %p389 = scmp.lt.s32.totalorder %s25, 5
      %p390 = pnand %p388, %p389
      %p391 = pneg %p390
      // Predicated region
      $region49: #{tpu_custom_call.1} parent=5 // pred_check
        _
      $region50: #{tpu_custom_call.1} parent=5 // pred_check_branch
        %393 = sbr.rel (%p390) target = $region52
      $region51: #{tpu_custom_call.1} parent=5 // pred_region
        %s394 = ssub.s32 %s25, 1
        // Predicated region
        $region53: #{tpu_custom_call.1} parent=51 // pred_check
          %p395 = pneg %p65
        $region54: #{tpu_custom_call.1} parent=51 // pred_check_branch
          %397 = sbr.rel (%p395) target = $region56
        $region55: #{tpu_custom_call.1} parent=51 // pred_region
          %398 = dma.done [#allocation8], 16
        $region56: #{tpu_custom_call.1} parent=51 // pred_fallthru
          _
        %s399 = sand.u32 %s82, 1
        %s400 = scalar_lea.sflag [#allocation6], %s399
        %s401 = sand.u32 %s82, 1
        %s402 = smul.addr %s401, 128
        %s403 = scalar_lea.vmem [#allocation9], %s402
        // Predicated region
        $region57: #{tpu_custom_call.1} parent=51 // pred_check
          %p404 = pneg %p95
        $region58: #{tpu_custom_call.1} parent=51 // pred_check_branch
          %406 = sbr.rel (%p404) target = $region60
        $region59: #{tpu_custom_call.1} parent=51 // pred_region
          %407 = dma.done %s400, 2048
        $region60: #{tpu_custom_call.1} parent=51 // pred_fallthru
          _
        // Predicated region
        $region61: #{tpu_custom_call.1} parent=51 // pred_check
          %p408 = pneg %p116
        $region62: #{tpu_custom_call.1} parent=51 // pred_check_branch
          %410 = sbr.rel (%p408) target = $region64
        $region63: #{tpu_custom_call.1} parent=51 // pred_region
          %411 = dma.done [#allocation11], 2048
        $region64: #{tpu_custom_call.1} parent=51 // pred_fallthru
          _
        // Predicated region
        $region65: #{tpu_custom_call.1} parent=51 // pred_check
          %p412 = pneg %p137
        $region66: #{tpu_custom_call.1} parent=51 // pred_check_branch
          %414 = sbr.rel (%p412) target = $region68
        $region67: #{tpu_custom_call.1} parent=51 // pred_region
          %415 = dma.done [#allocation11], 2048
        $region68: #{tpu_custom_call.1} parent=51 // pred_fallthru
          _
        %s416 = sand.u32 %s30, 1
        %s417 = scalar_lea.sflag [#allocation14], %s416
        %s418 = sand.u32 %s181, 1
        %s419 = smul.addr %s418, 128
        %s420 = scalar_lea.vmem [#allocation13], %s419
        // Predicated region
        $region69: #{tpu_custom_call.1} parent=51 // pred_check
          %p421 = pneg %p194
        $region70: #{tpu_custom_call.1} parent=51 // pred_check_branch
          %423 = sbr.rel (%p421) target = $region72
        $region71: #{tpu_custom_call.1} parent=51 // pred_region
          %424 = dma.done %s417, 2048
        $region72: #{tpu_custom_call.1} parent=51 // pred_fallthru
          _
        // Predicated region
        $region73: #{tpu_custom_call.1} parent=51 // pred_check
          %p425 = pneg %p215
        $region74: #{tpu_custom_call.1} parent=51 // pred_check_branch
          %427 = sbr.rel (%p425) target = $region76
        $region75: #{tpu_custom_call.1} parent=51 // pred_region
          %428 = dma.done [#allocation14], 2048
        $region76: #{tpu_custom_call.1} parent=51 // pred_fallthru
          _
        %429 = sfence
        %p430 = pneg %p65
        %p431 = pneg %p62
        %s432 = sand.u32 %s82, 1
        %s433 = scalar_lea.sflag [#allocation6], %s432
        %s434 = sand.u32 %s82, 1
        %s435 = smul.addr %s434, 128
        %s436 = scalar_lea.vmem [#allocation9], %s435
        %p437 = pneg %p95
        %p438 = pneg %p92
        %p439 = pneg %p116
        %p440 = pneg %p113
        %p441 = pneg %p137
        %p442 = pneg %p134
        %p443 = pneg %p158
        %p444 = pneg %p155
        %s445 = sand.u32 %s30, 1
        %s446 = scalar_lea.sflag [#allocation14], %s445
        %s447 = sand.u32 %s181, 1
        %s448 = smul.addr %s447, 128
        %s449 = scalar_lea.vmem [#allocation13], %s448
        %p450 = pneg %p194
        %p451 = pneg %p191
        %p452 = pneg %p215
        %p453 = pneg %p212
        %p454 = pneg %p236
        %p455 = pneg %p233
        %p456 = pneg %p266
        %p457 = pneg %p263
        %s458 = sand.u32 %s253, 1
        %s459 = scalar_lea.sflag [#allocation7], %s458
        %s460 = sand.u32 %s253, 1
        %s461 = smul.addr %s460, 128
        %s462 = scalar_lea.vmem [#allocation16], %s461
        %p463 = scmp.eq.s32.totalorder %s35, 0
        %s464 = scalar_select %p463, %s36, 0
        %s465 = smul.u32 16, %s464
        %s466 = ssub.s32 %s35, 1
        %p467 = scmp.gt.s32.totalorder %s466, 0
        %s468 = scalar_select %p467, %s466, 0
        %p469 = scmp.lt.s32.totalorder %s468, 1
        %s470 = scalar_select %p469, %s468, 1
        %p471 = scmp.eq.s32.totalorder %s35, 3
        %s472 = scalar_select %p471, %s36, 0
        %s473 = smul.u32 16, %s472
        %s474 = smul.u32 %s36, 128
        %s475 = smul.u32 %s37, 128
        %p476 = scmp.ge.s32.totalorder %s35, 1
        %p477 = scmp.le.s32.totalorder %s35, 2
        %p478 = pnand %p476, %p477
        %p479 = pneg %p478
        %p480 = scmp.eq.s32.totalorder %s35, 0
        %p481 = scmp.eq.s32.totalorder %s37, 0
        %p482 = pnand %p480, %p481
        %p483 = pneg %p482
        // Predicated region
        $region77: #{tpu_custom_call.1} parent=51 // pred_check
          _
        $region78: #{tpu_custom_call.1} parent=51 // pred_check_branch
          %485 = sbr.rel (%p482) target = $region80
        $region79: #{tpu_custom_call.1} parent=51 // pred_region
          %v486 = vld [vmem:[%s403] sm:$0xff]
          %v487 = vld [vmem:[%s403 + $0x8] sm:$0xff]
          %v488 = vld [vmem:[%s403 + $0x10] sm:$0xff]
          %v489 = vld [vmem:[%s403 + $0x18] sm:$0xff]
          %v490 = vld [vmem:[%s403 + $0x20] sm:$0xff]
          %v491 = vld [vmem:[%s403 + $0x28] sm:$0xff]
          %v492 = vld [vmem:[%s403 + $0x30] sm:$0xff]
          %v493 = vld [vmem:[%s403 + $0x38] sm:$0xff]
          %v494 = vld [vmem:[%s403 + $0x40] sm:$0xff]
          %v495 = vld [vmem:[%s403 + $0x48] sm:$0xff]
          %v496 = vld [vmem:[%s403 + $0x50] sm:$0xff]
          %v497 = vld [vmem:[%s403 + $0x58] sm:$0xff]
          %v498 = vld [vmem:[%s403 + $0x60] sm:$0xff]
          %v499 = vld [vmem:[%s403 + $0x68] sm:$0xff]
          %v500 = vld [vmem:[%s403 + $0x70] sm:$0xff]
          %v501 = vld [vmem:[%s403 + $0x78] sm:$0xff]
          %v502 = vld [vmem:[#allocation12] sm:$0xff]
          %v503 = vld [vmem:[#allocation12 + $0x8] sm:$0xff]
          %v504 = vld [vmem:[#allocation12 + $0x10] sm:$0xff]
          %v505 = vld [vmem:[#allocation12 + $0x18] sm:$0xff]
          %v506 = vld [vmem:[#allocation12 + $0x20] sm:$0xff]
          %v507 = vld [vmem:[#allocation12 + $0x28] sm:$0xff]
          %v508 = vld [vmem:[#allocation12 + $0x30] sm:$0xff]
          %v509 = vld [vmem:[#allocation12 + $0x38] sm:$0xff]
          %v510 = vld [vmem:[#allocation12 + $0x40] sm:$0xff]
          %v511 = vld [vmem:[#allocation12 + $0x48] sm:$0xff]
          %v512 = vld [vmem:[#allocation12 + $0x50] sm:$0xff]
          %v513 = vld [vmem:[#allocation12 + $0x58] sm:$0xff]
          %v514 = vld [vmem:[#allocation12 + $0x60] sm:$0xff]
          %v515 = vld [vmem:[#allocation12 + $0x68] sm:$0xff]
          %v516 = vld [vmem:[#allocation12 + $0x70] sm:$0xff]
          %v517 = vld [vmem:[#allocation12 + $0x78] sm:$0xff]
          %v518 = vld [vmem:[%s4] sm:$0x1]
          %v520 = vlaneseq
          %v521 = vshrl.u32 %v520, 7
          %v522 = vsub.s32 0, %v521
          %v523 = vrot.slane %v518, %v522
          %525 = vmatprep.subr.mxu0 0.0
          %526 = vmatpush1.msra.mxu0 %v517
          %527 = vmatprep.subr.mxu0 0.0
          %528 = vmatpush1.msra.mxu0 %v516
          %529 = vmatprep.subr.mxu0 0.0
          %530 = vmatpush1.msra.mxu0 %v515
          %531 = vmatprep.subr.mxu0 0.0
          %532 = vmatpush1.msra.mxu0 %v514
          %533 = vmatprep.subr.mxu0 0.0
          %534 = vmatpush1.msra.mxu0 %v513
          %535 = vmatprep.subr.mxu0 0.0
          %536 = vmatpush1.msra.mxu0 %v512
          %537 = vmatprep.subr.mxu0 0.0
          %538 = vmatpush1.msra.mxu0 %v511
          %539 = vmatprep.subr.mxu0 0.0
          %540 = vmatpush1.msra.mxu0 %v510
          %541 = vmatprep.subr.mxu0 0.0
          %542 = vmatpush1.msra.mxu0 %v509
          %543 = vmatprep.subr.mxu0 0.0
          %544 = vmatpush1.msra.mxu0 %v508
          %545 = vmatprep.subr.mxu0 0.0
          %546 = vmatpush1.msra.mxu0 %v507
          %547 = vmatprep.subr.mxu0 0.0
          %548 = vmatpush1.msra.mxu0 %v506
          %549 = vmatprep.subr.mxu0 0.0
          %550 = vmatpush1.msra.mxu0 %v505
          %551 = vmatprep.subr.mxu0 0.0
          %552 = vmatpush1.msra.mxu0 %v504
          %553 = vmatprep.subr.mxu0 0.0
          %554 = vmatpush1.msra.mxu0 %v503
          %555 = vmatprep.subr.mxu0 0.0
          %556 = vmatpush1.msra.mxu0 %v502
          %557 = vmatprep.subr.mxu0 0.0
          %558 = vmatpush2.msra.mxu0 0.0
          %559 = vmatprep.subr.mxu0 0.0
          %560 = vmatpush2.msra.mxu0 0.0
          %561 = vmatprep.subr.mxu0 0.0
          %562 = vmatpush2.msra.mxu0 0.0
          %563 = vmatprep.subr.mxu0 0.0
          %564 = vmatpush2.msra.mxu0 0.0
          %565 = vmatprep.subr.mxu0 0.0
          %566 = vmatpush2.msra.mxu0 0.0
          %567 = vmatprep.subr.mxu0 0.0
          %568 = vmatpush2.msra.mxu0 0.0
          %569 = vmatprep.subr.mxu0 0.0
          %570 = vmatpush2.msra.mxu0 0.0
          %571 = vmatprep.subr.mxu0 0.0
          %572 = vmatpush2.msra.mxu0 0.0
          %573 = vmatprep.subr.mxu0 0.0
          %574 = vmatpush2.msra.mxu0 0.0
          %575 = vmatprep.subr.mxu0 0.0
          %576 = vmatpush2.msra.mxu0 0.0
          %577 = vmatprep.subr.mxu0 0.0
          %578 = vmatpush2.msra.mxu0 0.0
          %579 = vmatprep.subr.mxu0 0.0
          %580 = vmatpush2.msra.mxu0 0.0
          %581 = vmatprep.subr.mxu0 0.0
          %582 = vmatpush2.msra.mxu0 0.0
          %583 = vmatprep.subr.mxu0 0.0
          %584 = vmatpush2.msra.mxu0 0.0
          %585 = vmatprep.subr.mxu0 0.0
          %586 = vmatpush2.msra.mxu0 0.0
          %587 = vmatprep.subr.mxu0 0.0
          %588 = vmatpush2.msra.mxu0 0.0
          %589 = vmatprep.mubr.f32.mxu0 0.0
          %590 = vmatmul.mubr.f32.gmra.mxu0 %v486
          %v591 = vpop.f32.mrf.mxu0
          %v592 = vadd.f32 %v523, %v591
          %v593 = vpop.f32.mrf.mxu0
          %594 = vmatprep.mubr.f32.mxu0 0.0
          %595 = vmatmul.mubr.f32.gmra.mxu0 %v487
          %v596 = vpop.f32.mrf.mxu0
          %v597 = vadd.f32 %v523, %v596
          %v598 = vpop.f32.mrf.mxu0
          %599 = vmatprep.mubr.f32.mxu0 0.0
          %600 = vmatmul.mubr.f32.gmra.mxu0 %v488
          %v601 = vpop.f32.mrf.mxu0
          %v602 = vadd.f32 %v523, %v601
          %v603 = vpop.f32.mrf.mxu0
          %604 = vmatprep.mubr.f32.mxu0 0.0
          %605 = vmatmul.mubr.f32.gmra.mxu0 %v489
          %v606 = vpop.f32.mrf.mxu0
          %v607 = vadd.f32 %v523, %v606
          %v608 = vpop.f32.mrf.mxu0
          %609 = vmatprep.mubr.f32.mxu0 0.0
          %610 = vmatmul.mubr.f32.gmra.mxu0 %v490
          %v611 = vpop.f32.mrf.mxu0
          %v612 = vadd.f32 %v523, %v611
          %v613 = vpop.f32.mrf.mxu0
          %614 = vmatprep.mubr.f32.mxu0 0.0
          %615 = vmatmul.mubr.f32.gmra.mxu0 %v491
          %v616 = vpop.f32.mrf.mxu0
          %v617 = vadd.f32 %v523, %v616
          %v618 = vpop.f32.mrf.mxu0
          %619 = vmatprep.mubr.f32.mxu0 0.0
          %620 = vmatmul.mubr.f32.gmra.mxu0 %v492
          %v621 = vpop.f32.mrf.mxu0
          %v622 = vadd.f32 %v523, %v621
          %v623 = vpop.f32.mrf.mxu0
          %624 = vmatprep.mubr.f32.mxu0 0.0
          %625 = vmatmul.mubr.f32.gmra.mxu0 %v493
          %v626 = vpop.f32.mrf.mxu0
          %v627 = vadd.f32 %v523, %v626
          %v628 = vpop.f32.mrf.mxu0
          %629 = vmatprep.mubr.f32.mxu0 0.0
          %630 = vmatmul.mubr.f32.gmra.mxu0 %v494
          %v631 = vpop.f32.mrf.mxu0
          %v632 = vadd.f32 %v523, %v631
          %v633 = vpop.f32.mrf.mxu0
          %634 = vmatprep.mubr.f32.mxu0 0.0
          %635 = vmatmul.mubr.f32.gmra.mxu0 %v495
          %v636 = vpop.f32.mrf.mxu0
          %v637 = vadd.f32 %v523, %v636
          %v638 = vpop.f32.mrf.mxu0
          %639 = vmatprep.mubr.f32.mxu0 0.0
          %640 = vmatmul.mubr.f32.gmra.mxu0 %v496
          %v641 = vpop.f32.mrf.mxu0
          %v642 = vadd.f32 %v523, %v641
          %v643 = vpop.f32.mrf.mxu0
          %644 = vmatprep.mubr.f32.mxu0 0.0
          %645 = vmatmul.mubr.f32.gmra.mxu0 %v497
          %v646 = vpop.f32.mrf.mxu0
          %v647 = vadd.f32 %v523, %v646
          %v648 = vpop.f32.mrf.mxu0
          %649 = vmatprep.mubr.f32.mxu0 0.0
          %650 = vmatmul.mubr.f32.gmra.mxu0 %v498
          %v651 = vpop.f32.mrf.mxu0
          %v652 = vadd.f32 %v523, %v651
          %v653 = vpop.f32.mrf.mxu0
          %654 = vmatprep.mubr.f32.mxu0 0.0
          %655 = vmatmul.mubr.f32.gmra.mxu0 %v499
          %v656 = vpop.f32.mrf.mxu0
          %v657 = vadd.f32 %v523, %v656
          %v658 = vpop.f32.mrf.mxu0
          %659 = vmatprep.mubr.f32.mxu0 0.0
          %660 = vmatmul.mubr.f32.gmra.mxu0 %v500
          %v661 = vpop.f32.mrf.mxu0
          %v662 = vadd.f32 %v523, %v661
          %v663 = vpop.f32.mrf.mxu0
          %664 = vmatprep.mubr.f32.mxu0 0.0
          %665 = vmatmul.mubr.f32.gmra.mxu0 %v501
          %v666 = vpop.f32.mrf.mxu0
          %v667 = vadd.f32 %v523, %v666
          %v668 = vpop.f32.mrf.mxu0
          %669 = vdwg.mxu0
          %v670 = vmax.f32 %v592, 0.0
          %v671 = vmax.f32 %v597, 0.0
          %v672 = vmax.f32 %v602, 0.0
          %v673 = vmax.f32 %v607, 0.0
          %v674 = vmax.f32 %v612, 0.0
          %v675 = vmax.f32 %v617, 0.0
          %v676 = vmax.f32 %v622, 0.0
          %v677 = vmax.f32 %v627, 0.0
          %v678 = vmax.f32 %v632, 0.0
          %v679 = vmax.f32 %v637, 0.0
          %v680 = vmax.f32 %v642, 0.0
          %v681 = vmax.f32 %v647, 0.0
          %v682 = vmax.f32 %v652, 0.0
          %v683 = vmax.f32 %v657, 0.0
          %v684 = vmax.f32 %v662, 0.0
          %v685 = vmax.f32 %v667, 0.0
          %s686 = scalar_lea.vmem [#allocation2], %s474
          %687 = vst [vmem:[%s686] sm:$0xff] %v670
          %688 = vst [vmem:[%s686 + $0x8] sm:$0xff] %v671
          %689 = vst [vmem:[%s686 + $0x10] sm:$0xff] %v672
          %690 = vst [vmem:[%s686 + $0x18] sm:$0xff] %v673
          %691 = vst [vmem:[%s686 + $0x20] sm:$0xff] %v674
          %692 = vst [vmem:[%s686 + $0x28] sm:$0xff] %v675
          %693 = vst [vmem:[%s686 + $0x30] sm:$0xff] %v676
          %694 = vst [vmem:[%s686 + $0x38] sm:$0xff] %v677
          %695 = vst [vmem:[%s686 + $0x40] sm:$0xff] %v678
          %696 = vst [vmem:[%s686 + $0x48] sm:$0xff] %v679
          %697 = vst [vmem:[%s686 + $0x50] sm:$0xff] %v680
          %698 = vst [vmem:[%s686 + $0x58] sm:$0xff] %v681
          %699 = vst [vmem:[%s686 + $0x60] sm:$0xff] %v682
          %700 = vst [vmem:[%s686 + $0x68] sm:$0xff] %v683
          %701 = vst [vmem:[%s686 + $0x70] sm:$0xff] %v684
          %702 = vst [vmem:[%s686 + $0x78] sm:$0xff] %v685
          %s703 = scalar_lea.vmem [#allocation3], %s474
          %704 = vst [vmem:[%s703] sm:$0xff] %v670
          %705 = vst [vmem:[%s703 + $0x8] sm:$0xff] %v671
          %706 = vst [vmem:[%s703 + $0x10] sm:$0xff] %v672
          %707 = vst [vmem:[%s703 + $0x18] sm:$0xff] %v673
          %708 = vst [vmem:[%s703 + $0x20] sm:$0xff] %v674
          %709 = vst [vmem:[%s703 + $0x28] sm:$0xff] %v675
          %710 = vst [vmem:[%s703 + $0x30] sm:$0xff] %v676
          %711 = vst [vmem:[%s703 + $0x38] sm:$0xff] %v677
          %712 = vst [vmem:[%s703 + $0x40] sm:$0xff] %v678
          %713 = vst [vmem:[%s703 + $0x48] sm:$0xff] %v679
          %714 = vst [vmem:[%s703 + $0x50] sm:$0xff] %v680
          %715 = vst [vmem:[%s703 + $0x58] sm:$0xff] %v681
          %716 = vst [vmem:[%s703 + $0x60] sm:$0xff] %v682
          %717 = vst [vmem:[%s703 + $0x68] sm:$0xff] %v683
          %718 = vst [vmem:[%s703 + $0x70] sm:$0xff] %v684
          %719 = vst [vmem:[%s703 + $0x78] sm:$0xff] %v685
        $region80: #{tpu_custom_call.1} parent=51 // pred_fallthru
          _
        %p720 = pnand %p479, %p481
        %p721 = pneg %p720
        // Predicated region
        $region81: #{tpu_custom_call.1} parent=51 // pred_check
          _
        $region82: #{tpu_custom_call.1} parent=51 // pred_check_branch
          %723 = sbr.rel (%p720) target = $region84
        $region83: #{tpu_custom_call.1} parent=51 // pred_region
          %724 = vst [vmem:[#allocation4] sm:$0xff] 0.0
          %725 = vst [vmem:[#allocation4 + $0x8] sm:$0xff] 0.0
          %726 = vst [vmem:[#allocation4 + $0x10] sm:$0xff] 0.0
          %727 = vst [vmem:[#allocation4 + $0x18] sm:$0xff] 0.0
          %728 = vst [vmem:[#allocation4 + $0x20] sm:$0xff] 0.0
          %729 = vst [vmem:[#allocation4 + $0x28] sm:$0xff] 0.0
          %730 = vst [vmem:[#allocation4 + $0x30] sm:$0xff] 0.0
          %731 = vst [vmem:[#allocation4 + $0x38] sm:$0xff] 0.0
          %732 = vst [vmem:[#allocation4 + $0x40] sm:$0xff] 0.0
          %733 = vst [vmem:[#allocation4 + $0x48] sm:$0xff] 0.0
          %734 = vst [vmem:[#allocation4 + $0x50] sm:$0xff] 0.0
          %735 = vst [vmem:[#allocation4 + $0x58] sm:$0xff] 0.0
          %736 = vst [vmem:[#allocation4 + $0x60] sm:$0xff] 0.0
          %737 = vst [vmem:[#allocation4 + $0x68] sm:$0xff] 0.0
          %738 = vst [vmem:[#allocation4 + $0x70] sm:$0xff] 0.0
          %739 = vst [vmem:[#allocation4 + $0x78] sm:$0xff] 0.0
        $region84: #{tpu_custom_call.1} parent=51 // pred_fallthru
          _
        // Predicated region
        $region85: #{tpu_custom_call.1} parent=51 // pred_check
          _
        $region86: #{tpu_custom_call.1} parent=51 // pred_check_branch
          %741 = sbr.rel (%p478) target = $region88
        $region87: #{tpu_custom_call.1} parent=51 // pred_region
          %s742 = ssub.s32 %s35, 1
          %p743 = scmp.lt.s32.totalorder %s742, 0
          %s744 = ssub.s32 0, %s742
          %s745 = scalar_select %p743, %s744, %s742
          %s746 = sand.u32 %s745, 1
          %s747 = ssub.s32 0, %s746
          %s748 = scalar_select %p743, %s747, %s746
          %p749 = scmp.ne.s32.totalorder %s748, 0
          %p750 = scmp.lt.s32.totalorder %s748, 0
          %p751 = pnand %p750, %p749
          %p752 = pneg %p751
          %s753 = sadd.s32 %s748, 2
          %s754 = scalar_select %p752, %s753, %s748
          %s755 = smul.u32 %s754, 128
          %s756 = sadd.s32 %s475, %s755
          %s757 = scalar_lea.vmem [#allocation2], %s756
          %v758 = vld [vmem:[%s757] sm:$0xff]
          %v759 = vld [vmem:[%s757 + $0x8] sm:$0xff]
          %v760 = vld [vmem:[%s757 + $0x10] sm:$0xff]
          %v761 = vld [vmem:[%s757 + $0x18] sm:$0xff]
          %v762 = vld [vmem:[%s757 + $0x20] sm:$0xff]
          %v763 = vld [vmem:[%s757 + $0x28] sm:$0xff]
          %v764 = vld [vmem:[%s757 + $0x30] sm:$0xff]
          %v765 = vld [vmem:[%s757 + $0x38] sm:$0xff]
          %v766 = vld [vmem:[%s757 + $0x40] sm:$0xff]
          %v767 = vld [vmem:[%s757 + $0x48] sm:$0xff]
          %v768 = vld [vmem:[%s757 + $0x50] sm:$0xff]
          %v769 = vld [vmem:[%s757 + $0x58] sm:$0xff]
          %v770 = vld [vmem:[%s757 + $0x60] sm:$0xff]
          %v771 = vld [vmem:[%s757 + $0x68] sm:$0xff]
          %v772 = vld [vmem:[%s757 + $0x70] sm:$0xff]
          %v773 = vld [vmem:[%s757 + $0x78] sm:$0xff]
          %v774 = vld [vmem:[#allocation4] sm:$0xff]
          %v775 = vld [vmem:[#allocation4 + $0x8] sm:$0xff]
          %v776 = vld [vmem:[#allocation4 + $0x10] sm:$0xff]
          %v777 = vld [vmem:[#allocation4 + $0x18] sm:$0xff]
          %v778 = vld [vmem:[#allocation4 + $0x20] sm:$0xff]
          %v779 = vld [vmem:[#allocation4 + $0x28] sm:$0xff]
          %v780 = vld [vmem:[#allocation4 + $0x30] sm:$0xff]
          %v781 = vld [vmem:[#allocation4 + $0x38] sm:$0xff]
          %v782 = vld [vmem:[#allocation4 + $0x40] sm:$0xff]
          %v783 = vld [vmem:[#allocation4 + $0x48] sm:$0xff]
          %v784 = vld [vmem:[#allocation4 + $0x50] sm:$0xff]
          %v785 = vld [vmem:[#allocation4 + $0x58] sm:$0xff]
          %v786 = vld [vmem:[#allocation4 + $0x60] sm:$0xff]
          %v787 = vld [vmem:[#allocation4 + $0x68] sm:$0xff]
          %v788 = vld [vmem:[#allocation4 + $0x70] sm:$0xff]
          %v789 = vld [vmem:[#allocation4 + $0x78] sm:$0xff]
          %v790 = vld [vmem:[#allocation10] sm:$0xff]
          %v791 = vld [vmem:[#allocation10 + $0x8] sm:$0xff]
          %v792 = vld [vmem:[#allocation10 + $0x10] sm:$0xff]
          %v793 = vld [vmem:[#allocation10 + $0x18] sm:$0xff]
          %v794 = vld [vmem:[#allocation10 + $0x20] sm:$0xff]
          %v795 = vld [vmem:[#allocation10 + $0x28] sm:$0xff]
          %v796 = vld [vmem:[#allocation10 + $0x30] sm:$0xff]
          %v797 = vld [vmem:[#allocation10 + $0x38] sm:$0xff]
          %v798 = vld [vmem:[#allocation10 + $0x40] sm:$0xff]
          %v799 = vld [vmem:[#allocation10 + $0x48] sm:$0xff]
          %v800 = vld [vmem:[#allocation10 + $0x50] sm:$0xff]
          %v801 = vld [vmem:[#allocation10 + $0x58] sm:$0xff]
          %v802 = vld [vmem:[#allocation10 + $0x60] sm:$0xff]
          %v803 = vld [vmem:[#allocation10 + $0x68] sm:$0xff]
          %v804 = vld [vmem:[#allocation10 + $0x70] sm:$0xff]
          %v805 = vld [vmem:[#allocation10 + $0x78] sm:$0xff]
          %806 = vmatprep.subr.mxu0 0.0
          %807 = vmatpush1.msra.mxu0 %v773
          %808 = vmatprep.subr.mxu0 0.0
          %809 = vmatpush1.msra.mxu0 %v772
          %810 = vmatprep.subr.mxu0 0.0
          %811 = vmatpush1.msra.mxu0 %v771
          %812 = vmatprep.subr.mxu0 0.0
          %813 = vmatpush1.msra.mxu0 %v770
          %814 = vmatprep.subr.mxu0 0.0
          %815 = vmatpush1.msra.mxu0 %v769
          %816 = vmatprep.subr.mxu0 0.0
          %817 = vmatpush1.msra.mxu0 %v768
          %818 = vmatprep.subr.mxu0 0.0
          %819 = vmatpush1.msra.mxu0 %v767
          %820 = vmatprep.subr.mxu0 0.0
          %821 = vmatpush1.msra.mxu0 %v766
          %822 = vmatprep.subr.mxu0 0.0
          %823 = vmatpush1.msra.mxu0 %v765
          %824 = vmatprep.subr.mxu0 0.0
          %825 = vmatpush1.msra.mxu0 %v764
          %826 = vmatprep.subr.mxu0 0.0
          %827 = vmatpush1.msra.mxu0 %v763
          %828 = vmatprep.subr.mxu0 0.0
          %829 = vmatpush1.msra.mxu0 %v762
          %830 = vmatprep.subr.mxu0 0.0
          %831 = vmatpush1.msra.mxu0 %v761
          %832 = vmatprep.subr.mxu0 0.0
          %833 = vmatpush1.msra.mxu0 %v760
          %834 = vmatprep.subr.mxu0 0.0
          %835 = vmatpush1.msra.mxu0 %v759
          %836 = vmatprep.subr.mxu0 0.0
          %837 = vmatpush1.msra.mxu0 %v758
          %838 = vmatprep.subr.mxu0 0.0
          %839 = vmatpush2.msra.mxu0 0.0
          %840 = vmatprep.subr.mxu0 0.0
          %841 = vmatpush2.msra.mxu0 0.0
          %842 = vmatprep.subr.mxu0 0.0
          %843 = vmatpush2.msra.mxu0 0.0
          %844 = vmatprep.subr.mxu0 0.0
          %845 = vmatpush2.msra.mxu0 0.0
          %846 = vmatprep.subr.mxu0 0.0
          %847 = vmatpush2.msra.mxu0 0.0
          %848 = vmatprep.subr.mxu0 0.0
          %849 = vmatpush2.msra.mxu0 0.0
          %850 = vmatprep.subr.mxu0 0.0
          %851 = vmatpush2.msra.mxu0 0.0
          %852 = vmatprep.subr.mxu0 0.0
          %853 = vmatpush2.msra.mxu0 0.0
          %854 = vmatprep.subr.mxu0 0.0
          %855 = vmatpush2.msra.mxu0 0.0
          %856 = vmatprep.subr.mxu0 0.0
          %857 = vmatpush2.msra.mxu0 0.0
          %858 = vmatprep.subr.mxu0 0.0
          %859 = vmatpush2.msra.mxu0 0.0
          %860 = vmatprep.subr.mxu0 0.0
          %861 = vmatpush2.msra.mxu0 0.0
          %862 = vmatprep.subr.mxu0 0.0
          %863 = vmatpush2.msra.mxu0 0.0
          %864 = vmatprep.subr.mxu0 0.0
          %865 = vmatpush2.msra.mxu0 0.0
          %866 = vmatprep.subr.mxu0 0.0
          %867 = vmatpush2.msra.mxu0 0.0
          %868 = vmatprep.subr.mxu0 0.0
          %869 = vmatpush2.msra.mxu0 0.0
          %870 = vmatprep.mubr.f32.mxu0 0.0
          %871 = vmatmul.mubr.f32.gmra.mxu0 %v790
          %v872 = vpop.f32.mrf.mxu0
          %v873 = vadd.f32 0.0, %v872
          %v874 = vpop.f32.mrf.mxu0
          %875 = vmatprep.mubr.f32.mxu0 0.0
          %876 = vmatmul.mubr.f32.gmra.mxu0 %v791
          %v877 = vpop.f32.mrf.mxu0
          %v878 = vadd.f32 0.0, %v877
          %v879 = vpop.f32.mrf.mxu0
          %880 = vmatprep.mubr.f32.mxu0 0.0
          %881 = vmatmul.mubr.f32.gmra.mxu0 %v792
          %v882 = vpop.f32.mrf.mxu0
          %v883 = vadd.f32 0.0, %v882
          %v884 = vpop.f32.mrf.mxu0
          %885 = vmatprep.mubr.f32.mxu0 0.0
          %886 = vmatmul.mubr.f32.gmra.mxu0 %v793
          %v887 = vpop.f32.mrf.mxu0
          %v888 = vadd.f32 0.0, %v887
          %v889 = vpop.f32.mrf.mxu0
          %890 = vmatprep.mubr.f32.mxu0 0.0
          %891 = vmatmul.mubr.f32.gmra.mxu0 %v794
          %v892 = vpop.f32.mrf.mxu0
          %v893 = vadd.f32 0.0, %v892
          %v894 = vpop.f32.mrf.mxu0
          %895 = vmatprep.mubr.f32.mxu0 0.0
          %896 = vmatmul.mubr.f32.gmra.mxu0 %v795
          %v897 = vpop.f32.mrf.mxu0
          %v898 = vadd.f32 0.0, %v897
          %v899 = vpop.f32.mrf.mxu0
          %900 = vmatprep.mubr.f32.mxu0 0.0
          %901 = vmatmul.mubr.f32.gmra.mxu0 %v796
          %v902 = vpop.f32.mrf.mxu0
          %v903 = vadd.f32 0.0, %v902
          %v904 = vpop.f32.mrf.mxu0
          %905 = vmatprep.mubr.f32.mxu0 0.0
          %906 = vmatmul.mubr.f32.gmra.mxu0 %v797
          %v907 = vpop.f32.mrf.mxu0
          %v908 = vadd.f32 0.0, %v907
          %v909 = vpop.f32.mrf.mxu0
          %910 = vmatprep.mubr.f32.mxu0 0.0
          %911 = vmatmul.mubr.f32.gmra.mxu0 %v798
          %v912 = vpop.f32.mrf.mxu0
          %v913 = vadd.f32 0.0, %v912
          %v914 = vpop.f32.mrf.mxu0
          %915 = vmatprep.mubr.f32.mxu0 0.0
          %916 = vmatmul.mubr.f32.gmra.mxu0 %v799
          %v917 = vpop.f32.mrf.mxu0
          %v918 = vadd.f32 0.0, %v917
          %v919 = vpop.f32.mrf.mxu0
          %920 = vmatprep.mubr.f32.mxu0 0.0
          %921 = vmatmul.mubr.f32.gmra.mxu0 %v800
          %v922 = vpop.f32.mrf.mxu0
          %v923 = vadd.f32 0.0, %v922
          %v924 = vpop.f32.mrf.mxu0
          %925 = vmatprep.mubr.f32.mxu0 0.0
          %926 = vmatmul.mubr.f32.gmra.mxu0 %v801
          %v927 = vpop.f32.mrf.mxu0
          %v928 = vadd.f32 0.0, %v927
          %v929 = vpop.f32.mrf.mxu0
          %930 = vmatprep.mubr.f32.mxu0 0.0
          %931 = vmatmul.mubr.f32.gmra.mxu0 %v802
          %v932 = vpop.f32.mrf.mxu0
          %v933 = vadd.f32 0.0, %v932
          %v934 = vpop.f32.mrf.mxu0
          %935 = vmatprep.mubr.f32.mxu0 0.0
          %936 = vmatmul.mubr.f32.gmra.mxu0 %v803
          %v937 = vpop.f32.mrf.mxu0
          %v938 = vadd.f32 0.0, %v937
          %v939 = vpop.f32.mrf.mxu0
          %940 = vmatprep.mubr.f32.mxu0 0.0
          %941 = vmatmul.mubr.f32.gmra.mxu0 %v804
          %v942 = vpop.f32.mrf.mxu0
          %v943 = vadd.f32 0.0, %v942
          %v944 = vpop.f32.mrf.mxu0
          %945 = vmatprep.mubr.f32.mxu0 0.0
          %946 = vmatmul.mubr.f32.gmra.mxu0 %v805
          %v947 = vpop.f32.mrf.mxu0
          %v948 = vadd.f32 0.0, %v947
          %v949 = vpop.f32.mrf.mxu0
          %950 = vdwg.mxu0
          %v951 = vadd.f32 %v774, %v873
          %v952 = vadd.f32 %v775, %v878
          %v953 = vadd.f32 %v776, %v883
          %v954 = vadd.f32 %v777, %v888
          %v955 = vadd.f32 %v778, %v893
          %v956 = vadd.f32 %v779, %v898
          %v957 = vadd.f32 %v780, %v903
          %v958 = vadd.f32 %v781, %v908
          %v959 = vadd.f32 %v782, %v913
          %v960 = vadd.f32 %v783, %v918
          %v961 = vadd.f32 %v784, %v923
          %v962 = vadd.f32 %v785, %v928
          %v963 = vadd.f32 %v786, %v933
          %v964 = vadd.f32 %v787, %v938
          %v965 = vadd.f32 %v788, %v943
          %v966 = vadd.f32 %v789, %v948
          %967 = vst [vmem:[#allocation4] sm:$0xff] %v951
          %968 = vst [vmem:[#allocation4 + $0x8] sm:$0xff] %v952
          %969 = vst [vmem:[#allocation4 + $0x10] sm:$0xff] %v953
          %970 = vst [vmem:[#allocation4 + $0x18] sm:$0xff] %v954
          %971 = vst [vmem:[#allocation4 + $0x20] sm:$0xff] %v955
          %972 = vst [vmem:[#allocation4 + $0x28] sm:$0xff] %v956
          %973 = vst [vmem:[#allocation4 + $0x30] sm:$0xff] %v957
          %974 = vst [vmem:[#allocation4 + $0x38] sm:$0xff] %v958
          %975 = vst [vmem:[#allocation4 + $0x40] sm:$0xff] %v959
          %976 = vst [vmem:[#allocation4 + $0x48] sm:$0xff] %v960
          %977 = vst [vmem:[#allocation4 + $0x50] sm:$0xff] %v961
          %978 = vst [vmem:[#allocation4 + $0x58] sm:$0xff] %v962
          %979 = vst [vmem:[#allocation4 + $0x60] sm:$0xff] %v963
          %980 = vst [vmem:[#allocation4 + $0x68] sm:$0xff] %v964
          %981 = vst [vmem:[#allocation4 + $0x70] sm:$0xff] %v965
          %982 = vst [vmem:[#allocation4 + $0x78] sm:$0xff] %v966
        $region88: #{tpu_custom_call.1} parent=51 // pred_fallthru
          _
        // Predicated region
        $region89: #{tpu_custom_call.1} parent=51 // pred_check
          _
        $region90: #{tpu_custom_call.1} parent=51 // pred_check_branch
          %984 = sbr.rel (%p720) target = $region92
        $region91: #{tpu_custom_call.1} parent=51 // pred_region
          %s985 = ssub.s32 %s35, 1
          %p986 = scmp.gt.s32.totalorder %s985, 0
          %s987 = scalar_select %p986, %s985, 0
          %p988 = scmp.lt.s32.totalorder %s987, 1
          %s989 = scalar_select %p988, %s987, 1
          %s990 = sld [smem:[#allocation5 + %s989]]
          %p991 = scmp.lt.s32.totalorder %s985, 0
          %s992 = ssub.s32 0, %s985
          %s993 = scalar_select %p991, %s992, %s985
          %s994 = sand.u32 %s993, 1
          %s995 = ssub.s32 0, %s994
          %s996 = scalar_select %p991, %s995, %s994
          %p997 = scmp.ne.s32.totalorder %s996, 0
          %p998 = scmp.lt.s32.totalorder %s996, 0
          %p999 = pnand %p998, %p997
          %p1000 = pneg %p999
          %s1001 = sadd.s32 %s996, 2
          %s1002 = scalar_select %p1000, %s1001, %s996
          %p1003 = scmp.lt.s32.totalorder %s35, 0
          %s1004 = ssub.s32 0, %s35
          %s1005 = scalar_select %p1003, %s1004, %s35
          %s1006 = sand.u32 %s1005, 1
          %s1007 = ssub.s32 0, %s1006
          %s1008 = scalar_select %p1003, %s1007, %s1006
          %p1009 = scmp.ne.s32.totalorder %s1008, 0
          %p1010 = scmp.lt.s32.totalorder %s1008, 0
          %p1011 = pnand %p1010, %p1009
          %p1012 = pneg %p1011
          %s1013 = sadd.s32 %s1008, 2
          %s1014 = scalar_select %p1012, %s1013, %s1008
          %v1015 = vld [vmem:[#allocation4] sm:$0xff]
          %v1016 = vld [vmem:[#allocation4 + $0x8] sm:$0xff]
          %v1017 = vld [vmem:[#allocation4 + $0x10] sm:$0xff]
          %v1018 = vld [vmem:[#allocation4 + $0x18] sm:$0xff]
          %v1019 = vld [vmem:[#allocation4 + $0x20] sm:$0xff]
          %v1020 = vld [vmem:[#allocation4 + $0x28] sm:$0xff]
          %v1021 = vld [vmem:[#allocation4 + $0x30] sm:$0xff]
          %v1022 = vld [vmem:[#allocation4 + $0x38] sm:$0xff]
          %v1023 = vld [vmem:[#allocation4 + $0x40] sm:$0xff]
          %v1024 = vld [vmem:[#allocation4 + $0x48] sm:$0xff]
          %v1025 = vld [vmem:[#allocation4 + $0x50] sm:$0xff]
          %v1026 = vld [vmem:[#allocation4 + $0x58] sm:$0xff]
          %v1027 = vld [vmem:[#allocation4 + $0x60] sm:$0xff]
          %v1028 = vld [vmem:[#allocation4 + $0x68] sm:$0xff]
          %v1029 = vld [vmem:[#allocation4 + $0x70] sm:$0xff]
          %v1030 = vld [vmem:[#allocation4 + $0x78] sm:$0xff]
          %s1031 = smul.u32 %s1002, 128
          %s1032 = sadd.s32 %s474, %s1031
          %s1033 = scalar_lea.vmem [#allocation2], %s1032
          %v1034 = vld [vmem:[%s1033] sm:$0xff]
          %v1035 = vld [vmem:[%s1033 + $0x8] sm:$0xff]
          %v1036 = vld [vmem:[%s1033 + $0x10] sm:$0xff]
          %v1037 = vld [vmem:[%s1033 + $0x18] sm:$0xff]
          %v1038 = vld [vmem:[%s1033 + $0x20] sm:$0xff]
          %v1039 = vld [vmem:[%s1033 + $0x28] sm:$0xff]
          %v1040 = vld [vmem:[%s1033 + $0x30] sm:$0xff]
          %v1041 = vld [vmem:[%s1033 + $0x38] sm:$0xff]
          %v1042 = vld [vmem:[%s1033 + $0x40] sm:$0xff]
          %v1043 = vld [vmem:[%s1033 + $0x48] sm:$0xff]
          %v1044 = vld [vmem:[%s1033 + $0x50] sm:$0xff]
          %v1045 = vld [vmem:[%s1033 + $0x58] sm:$0xff]
          %v1046 = vld [vmem:[%s1033 + $0x60] sm:$0xff]
          %v1047 = vld [vmem:[%s1033 + $0x68] sm:$0xff]
          %v1048 = vld [vmem:[%s1033 + $0x70] sm:$0xff]
          %v1049 = vld [vmem:[%s1033 + $0x78] sm:$0xff]
          %s1050 = scalar_lea.vmem [#allocation3], %s474
          %v1051 = vld [vmem:[%s1050] sm:$0xff]
          %v1052 = vld [vmem:[%s1050 + $0x8] sm:$0xff]
          %v1053 = vld [vmem:[%s1050 + $0x10] sm:$0xff]
          %v1054 = vld [vmem:[%s1050 + $0x18] sm:$0xff]
          %v1055 = vld [vmem:[%s1050 + $0x20] sm:$0xff]
          %v1056 = vld [vmem:[%s1050 + $0x28] sm:$0xff]
          %v1057 = vld [vmem:[%s1050 + $0x30] sm:$0xff]
          %v1058 = vld [vmem:[%s1050 + $0x38] sm:$0xff]
          %v1059 = vld [vmem:[%s1050 + $0x40] sm:$0xff]
          %v1060 = vld [vmem:[%s1050 + $0x48] sm:$0xff]
          %v1061 = vld [vmem:[%s1050 + $0x50] sm:$0xff]
          %v1062 = vld [vmem:[%s1050 + $0x58] sm:$0xff]
          %v1063 = vld [vmem:[%s1050 + $0x60] sm:$0xff]
          %v1064 = vld [vmem:[%s1050 + $0x68] sm:$0xff]
          %v1065 = vld [vmem:[%s1050 + $0x70] sm:$0xff]
          %v1066 = vld [vmem:[%s1050 + $0x78] sm:$0xff]
          %v1067 = vmul.f32 %v1015, 0.9
          %v1068 = vmul.f32 %v1016, 0.9
          %v1069 = vmul.f32 %v1017, 0.9
          %v1070 = vmul.f32 %v1018, 0.9
          %v1071 = vmul.f32 %v1019, 0.9
          %v1072 = vmul.f32 %v1020, 0.9
          %v1073 = vmul.f32 %v1021, 0.9
          %v1074 = vmul.f32 %v1022, 0.9
          %v1075 = vmul.f32 %v1023, 0.9
          %v1076 = vmul.f32 %v1024, 0.9
          %v1077 = vmul.f32 %v1025, 0.9
          %v1078 = vmul.f32 %v1026, 0.9
          %v1079 = vmul.f32 %v1027, 0.9
          %v1080 = vmul.f32 %v1028, 0.9
          %v1081 = vmul.f32 %v1029, 0.9
          %v1082 = vmul.f32 %v1030, 0.9
          %v1083 = vmul.f32 %v1051, 0.1
          %v1084 = vmul.f32 %v1052, 0.1
          %v1085 = vmul.f32 %v1053, 0.1
          %v1086 = vmul.f32 %v1054, 0.1
          %v1087 = vmul.f32 %v1055, 0.1
          %v1088 = vmul.f32 %v1056, 0.1
          %v1089 = vmul.f32 %v1057, 0.1
          %v1090 = vmul.f32 %v1058, 0.1
          %v1091 = vmul.f32 %v1059, 0.1
          %v1092 = vmul.f32 %v1060, 0.1
          %v1093 = vmul.f32 %v1061, 0.1
          %v1094 = vmul.f32 %v1062, 0.1
          %v1095 = vmul.f32 %v1063, 0.1
          %v1096 = vmul.f32 %v1064, 0.1
          %v1097 = vmul.f32 %v1065, 0.1
          %v1098 = vmul.f32 %v1066, 0.1
          %v1099 = vadd.f32 %v1067, %v1083
          %v1100 = vadd.f32 %v1068, %v1084
          %v1101 = vadd.f32 %v1069, %v1085
          %v1102 = vadd.f32 %v1070, %v1086
          %v1103 = vadd.f32 %v1071, %v1087
          %v1104 = vadd.f32 %v1072, %v1088
          %v1105 = vadd.f32 %v1073, %v1089
          %v1106 = vadd.f32 %v1074, %v1090
          %v1107 = vadd.f32 %v1075, %v1091
          %v1108 = vadd.f32 %v1076, %v1092
          %v1109 = vadd.f32 %v1077, %v1093
          %v1110 = vadd.f32 %v1078, %v1094
          %v1111 = vadd.f32 %v1079, %v1095
          %v1112 = vadd.f32 %v1080, %v1096
          %v1113 = vadd.f32 %v1081, %v1097
          %v1114 = vadd.f32 %v1082, %v1098
          %v1115 = vld [vmem:[%s420] sm:$0xff]
          %v1116 = vld [vmem:[%s420 + $0x8] sm:$0xff]
          %v1117 = vld [vmem:[%s420 + $0x10] sm:$0xff]
          %v1118 = vld [vmem:[%s420 + $0x18] sm:$0xff]
          %v1119 = vld [vmem:[%s420 + $0x20] sm:$0xff]
          %v1120 = vld [vmem:[%s420 + $0x28] sm:$0xff]
          %v1121 = vld [vmem:[%s420 + $0x30] sm:$0xff]
          %v1122 = vld [vmem:[%s420 + $0x38] sm:$0xff]
          %v1123 = vld [vmem:[%s420 + $0x40] sm:$0xff]
          %v1124 = vld [vmem:[%s420 + $0x48] sm:$0xff]
          %v1125 = vld [vmem:[%s420 + $0x50] sm:$0xff]
          %v1126 = vld [vmem:[%s420 + $0x58] sm:$0xff]
          %v1127 = vld [vmem:[%s420 + $0x60] sm:$0xff]
          %v1128 = vld [vmem:[%s420 + $0x68] sm:$0xff]
          %v1129 = vld [vmem:[%s420 + $0x70] sm:$0xff]
          %v1130 = vld [vmem:[%s420 + $0x78] sm:$0xff]
          %1131 = vmatprep.subr.mxu0 0.0
          %1132 = vmatpush1.msra.mxu0 %v1130
          %1133 = vmatprep.subr.mxu0 0.0
          %1134 = vmatpush1.msra.mxu0 %v1129
          %1135 = vmatprep.subr.mxu0 0.0
          %1136 = vmatpush1.msra.mxu0 %v1128
          %1137 = vmatprep.subr.mxu0 0.0
          %1138 = vmatpush1.msra.mxu0 %v1127
          %1139 = vmatprep.subr.mxu0 0.0
          %1140 = vmatpush1.msra.mxu0 %v1126
          %1141 = vmatprep.subr.mxu0 0.0
          %1142 = vmatpush1.msra.mxu0 %v1125
          %1143 = vmatprep.subr.mxu0 0.0
          %1144 = vmatpush1.msra.mxu0 %v1124
          %1145 = vmatprep.subr.mxu0 0.0
          %1146 = vmatpush1.msra.mxu0 %v1123
          %1147 = vmatprep.subr.mxu0 0.0
          %1148 = vmatpush1.msra.mxu0 %v1122
          %1149 = vmatprep.subr.mxu0 0.0
          %1150 = vmatpush1.msra.mxu0 %v1121
          %1151 = vmatprep.subr.mxu0 0.0
          %1152 = vmatpush1.msra.mxu0 %v1120
          %1153 = vmatprep.subr.mxu0 0.0
          %1154 = vmatpush1.msra.mxu0 %v1119
          %1155 = vmatprep.subr.mxu0 0.0
          %1156 = vmatpush1.msra.mxu0 %v1118
          %1157 = vmatprep.subr.mxu0 0.0
          %1158 = vmatpush1.msra.mxu0 %v1117
          %1159 = vmatprep.subr.mxu0 0.0
          %1160 = vmatpush1.msra.mxu0 %v1116
          %1161 = vmatprep.subr.mxu0 0.0
          %1162 = vmatpush1.msra.mxu0 %v1115
          %1163 = vmatprep.subr.mxu0 0.0
          %1164 = vmatpush2.msra.mxu0 0.0
          %1165 = vmatprep.subr.mxu0 0.0
          %1166 = vmatpush2.msra.mxu0 0.0
          %1167 = vmatprep.subr.mxu0 0.0
          %1168 = vmatpush2.msra.mxu0 0.0
          %1169 = vmatprep.subr.mxu0 0.0
          %1170 = vmatpush2.msra.mxu0 0.0
          %1171 = vmatprep.subr.mxu0 0.0
          %1172 = vmatpush2.msra.mxu0 0.0
          %1173 = vmatprep.subr.mxu0 0.0
          %1174 = vmatpush2.msra.mxu0 0.0
          %1175 = vmatprep.subr.mxu0 0.0
          %1176 = vmatpush2.msra.mxu0 0.0
          %1177 = vmatprep.subr.mxu0 0.0
          %1178 = vmatpush2.msra.mxu0 0.0
          %1179 = vmatprep.subr.mxu0 0.0
          %1180 = vmatpush2.msra.mxu0 0.0
          %1181 = vmatprep.subr.mxu0 0.0
          %1182 = vmatpush2.msra.mxu0 0.0
          %1183 = vmatprep.subr.mxu0 0.0
          %1184 = vmatpush2.msra.mxu0 0.0
          %1185 = vmatprep.subr.mxu0 0.0
          %1186 = vmatpush2.msra.mxu0 0.0
          %1187 = vmatprep.subr.mxu0 0.0
          %1188 = vmatpush2.msra.mxu0 0.0
          %1189 = vmatprep.subr.mxu0 0.0
          %1190 = vmatpush2.msra.mxu0 0.0
          %1191 = vmatprep.subr.mxu0 0.0
          %1192 = vmatpush2.msra.mxu0 0.0
          %1193 = vmatprep.subr.mxu0 0.0
          %1194 = vmatpush2.msra.mxu0 0.0
          %1195 = vmatprep.mubr.f32.mxu0 0.0
          %1196 = vmatmul.mubr.f32.gmra.mxu0 %v1099
          %v1197 = vpop.f32.mrf.mxu0
          %v1198 = vadd.f32 0.0, %v1197
          %v1199 = vpop.f32.mrf.mxu0
          %1200 = vmatprep.mubr.f32.mxu0 0.0
          %1201 = vmatmul.mubr.f32.gmra.mxu0 %v1100
          %v1202 = vpop.f32.mrf.mxu0
          %v1203 = vadd.f32 0.0, %v1202
          %v1204 = vpop.f32.mrf.mxu0
          %1205 = vmatprep.mubr.f32.mxu0 0.0
          %1206 = vmatmul.mubr.f32.gmra.mxu0 %v1101
          %v1207 = vpop.f32.mrf.mxu0
          %v1208 = vadd.f32 0.0, %v1207
          %v1209 = vpop.f32.mrf.mxu0
          %1210 = vmatprep.mubr.f32.mxu0 0.0
          %1211 = vmatmul.mubr.f32.gmra.mxu0 %v1102
          %v1212 = vpop.f32.mrf.mxu0
          %v1213 = vadd.f32 0.0, %v1212
          %v1214 = vpop.f32.mrf.mxu0
          %1215 = vmatprep.mubr.f32.mxu0 0.0
          %1216 = vmatmul.mubr.f32.gmra.mxu0 %v1103
          %v1217 = vpop.f32.mrf.mxu0
          %v1218 = vadd.f32 0.0, %v1217
          %v1219 = vpop.f32.mrf.mxu0
          %1220 = vmatprep.mubr.f32.mxu0 0.0
          %1221 = vmatmul.mubr.f32.gmra.mxu0 %v1104
          %v1222 = vpop.f32.mrf.mxu0
          %v1223 = vadd.f32 0.0, %v1222
          %v1224 = vpop.f32.mrf.mxu0
          %1225 = vmatprep.mubr.f32.mxu0 0.0
          %1226 = vmatmul.mubr.f32.gmra.mxu0 %v1105
          %v1227 = vpop.f32.mrf.mxu0
          %v1228 = vadd.f32 0.0, %v1227
          %v1229 = vpop.f32.mrf.mxu0
          %1230 = vmatprep.mubr.f32.mxu0 0.0
          %1231 = vmatmul.mubr.f32.gmra.mxu0 %v1106
          %v1232 = vpop.f32.mrf.mxu0
          %v1233 = vadd.f32 0.0, %v1232
          %v1234 = vpop.f32.mrf.mxu0
          %1235 = vmatprep.mubr.f32.mxu0 0.0
          %1236 = vmatmul.mubr.f32.gmra.mxu0 %v1107
          %v1237 = vpop.f32.mrf.mxu0
          %v1238 = vadd.f32 0.0, %v1237
          %v1239 = vpop.f32.mrf.mxu0
          %1240 = vmatprep.mubr.f32.mxu0 0.0
          %1241 = vmatmul.mubr.f32.gmra.mxu0 %v1108
          %v1242 = vpop.f32.mrf.mxu0
          %v1243 = vadd.f32 0.0, %v1242
          %v1244 = vpop.f32.mrf.mxu0
          %1245 = vmatprep.mubr.f32.mxu0 0.0
          %1246 = vmatmul.mubr.f32.gmra.mxu0 %v1109
          %v1247 = vpop.f32.mrf.mxu0
          %v1248 = vadd.f32 0.0, %v1247
          %v1249 = vpop.f32.mrf.mxu0
          %1250 = vmatprep.mubr.f32.mxu0 0.0
          %1251 = vmatmul.mubr.f32.gmra.mxu0 %v1110
          %v1252 = vpop.f32.mrf.mxu0
          %v1253 = vadd.f32 0.0, %v1252
          %v1254 = vpop.f32.mrf.mxu0
          %1255 = vmatprep.mubr.f32.mxu0 0.0
          %1256 = vmatmul.mubr.f32.gmra.mxu0 %v1111
          %v1257 = vpop.f32.mrf.mxu0
          %v1258 = vadd.f32 0.0, %v1257
          %v1259 = vpop.f32.mrf.mxu0
          %1260 = vmatprep.mubr.f32.mxu0 0.0
          %1261 = vmatmul.mubr.f32.gmra.mxu0 %v1112
          %v1262 = vpop.f32.mrf.mxu0
          %v1263 = vadd.f32 0.0, %v1262
          %v1264 = vpop.f32.mrf.mxu0
          %1265 = vmatprep.mubr.f32.mxu0 0.0
          %1266 = vmatmul.mubr.f32.gmra.mxu0 %v1113
          %v1267 = vpop.f32.mrf.mxu0
          %v1268 = vadd.f32 0.0, %v1267
          %v1269 = vpop.f32.mrf.mxu0
          %1270 = vmatprep.mubr.f32.mxu0 0.0
          %1271 = vmatmul.mubr.f32.gmra.mxu0 %v1114
          %v1272 = vpop.f32.mrf.mxu0
          %v1273 = vadd.f32 0.0, %v1272
          %v1274 = vpop.f32.mrf.mxu0
          %1275 = vdwg.mxu0
          %v1276 = vstv %s990
          %v1277 = vmul.f32 %v1276, %v1198
          %v1278 = vmul.f32 %v1276, %v1203
          %v1279 = vmul.f32 %v1276, %v1208
          %v1280 = vmul.f32 %v1276, %v1213
          %v1281 = vmul.f32 %v1276, %v1218
          %v1282 = vmul.f32 %v1276, %v1223
          %v1283 = vmul.f32 %v1276, %v1228
          %v1284 = vmul.f32 %v1276, %v1233
          %v1285 = vmul.f32 %v1276, %v1238
          %v1286 = vmul.f32 %v1276, %v1243
          %v1287 = vmul.f32 %v1276, %v1248
          %v1288 = vmul.f32 %v1276, %v1253
          %v1289 = vmul.f32 %v1276, %v1258
          %v1290 = vmul.f32 %v1276, %v1263
          %v1291 = vmul.f32 %v1276, %v1268
          %v1292 = vmul.f32 %v1276, %v1273
          %s1293 = ssub.f32 1.0, %s990
          %v1294 = vstv %s1293
          %v1295 = vmul.f32 %v1294, %v1099
          %v1296 = vmul.f32 %v1294, %v1100
          %v1297 = vmul.f32 %v1294, %v1101
          %v1298 = vmul.f32 %v1294, %v1102
          %v1299 = vmul.f32 %v1294, %v1103
          %v1300 = vmul.f32 %v1294, %v1104
          %v1301 = vmul.f32 %v1294, %v1105
          %v1302 = vmul.f32 %v1294, %v1106
          %v1303 = vmul.f32 %v1294, %v1107
          %v1304 = vmul.f32 %v1294, %v1108
          %v1305 = vmul.f32 %v1294, %v1109
          %v1306 = vmul.f32 %v1294, %v1110
          %v1307 = vmul.f32 %v1294, %v1111
          %v1308 = vmul.f32 %v1294, %v1112
          %v1309 = vmul.f32 %v1294, %v1113
          %v1310 = vmul.f32 %v1294, %v1114
          %v1311 = vadd.f32 %v1277, %v1295
          %v1312 = vadd.f32 %v1278, %v1296
          %v1313 = vadd.f32 %v1279, %v1297
          %v1314 = vadd.f32 %v1280, %v1298
          %v1315 = vadd.f32 %v1281, %v1299
          %v1316 = vadd.f32 %v1282, %v1300
          %v1317 = vadd.f32 %v1283, %v1301
          %v1318 = vadd.f32 %v1284, %v1302
          %v1319 = vadd.f32 %v1285, %v1303
          %v1320 = vadd.f32 %v1286, %v1304
          %v1321 = vadd.f32 %v1287, %v1305
          %v1322 = vadd.f32 %v1288, %v1306
          %v1323 = vadd.f32 %v1289, %v1307
          %v1324 = vadd.f32 %v1290, %v1308
          %v1325 = vadd.f32 %v1291, %v1309
          %v1326 = vadd.f32 %v1292, %v1310
          %v1327 = vadd.f32 %v1311, %v1034
          %v1328 = vadd.f32 %v1312, %v1035
          %v1329 = vadd.f32 %v1313, %v1036
          %v1330 = vadd.f32 %v1314, %v1037
          %v1331 = vadd.f32 %v1315, %v1038
          %v1332 = vadd.f32 %v1316, %v1039
          %v1333 = vadd.f32 %v1317, %v1040
          %v1334 = vadd.f32 %v1318, %v1041
          %v1335 = vadd.f32 %v1319, %v1042
          %v1336 = vadd.f32 %v1320, %v1043
          %v1337 = vadd.f32 %v1321, %v1044
          %v1338 = vadd.f32 %v1322, %v1045
          %v1339 = vadd.f32 %v1323, %v1046
          %v1340 = vadd.f32 %v1324, %v1047
          %v1341 = vadd.f32 %v1325, %v1048
          %v1342 = vadd.f32 %v1326, %v1049
          %v1343 = vmax.f32 %v1327, 0.0
          %v1344 = vmax.f32 %v1328, 0.0
          %v1345 = vmax.f32 %v1329, 0.0
          %v1346 = vmax.f32 %v1330, 0.0
          %v1347 = vmax.f32 %v1331, 0.0
          %v1348 = vmax.f32 %v1332, 0.0
          %v1349 = vmax.f32 %v1333, 0.0
          %v1350 = vmax.f32 %v1334, 0.0
          %v1351 = vmax.f32 %v1335, 0.0
          %v1352 = vmax.f32 %v1336, 0.0
          %v1353 = vmax.f32 %v1337, 0.0
          %v1354 = vmax.f32 %v1338, 0.0
          %v1355 = vmax.f32 %v1339, 0.0
          %v1356 = vmax.f32 %v1340, 0.0
          %v1357 = vmax.f32 %v1341, 0.0
          %v1358 = vmax.f32 %v1342, 0.0
          %s1359 = smul.u32 %s1014, 128
          %s1360 = sadd.s32 %s474, %s1359
          %s1361 = scalar_lea.vmem [#allocation2], %s1360
          %1362 = vst [vmem:[%s1361] sm:$0xff] %v1343
          %1363 = vst [vmem:[%s1361 + $0x8] sm:$0xff] %v1344
          %1364 = vst [vmem:[%s1361 + $0x10] sm:$0xff] %v1345
          %1365 = vst [vmem:[%s1361 + $0x18] sm:$0xff] %v1346
          %1366 = vst [vmem:[%s1361 + $0x20] sm:$0xff] %v1347
          %1367 = vst [vmem:[%s1361 + $0x28] sm:$0xff] %v1348
          %1368 = vst [vmem:[%s1361 + $0x30] sm:$0xff] %v1349
          %1369 = vst [vmem:[%s1361 + $0x38] sm:$0xff] %v1350
          %1370 = vst [vmem:[%s1361 + $0x40] sm:$0xff] %v1351
          %1371 = vst [vmem:[%s1361 + $0x48] sm:$0xff] %v1352
          %1372 = vst [vmem:[%s1361 + $0x50] sm:$0xff] %v1353
          %1373 = vst [vmem:[%s1361 + $0x58] sm:$0xff] %v1354
          %1374 = vst [vmem:[%s1361 + $0x60] sm:$0xff] %v1355
          %1375 = vst [vmem:[%s1361 + $0x68] sm:$0xff] %v1356
          %1376 = vst [vmem:[%s1361 + $0x70] sm:$0xff] %v1357
          %1377 = vst [vmem:[%s1361 + $0x78] sm:$0xff] %v1358
        $region92: #{tpu_custom_call.1} parent=51 // pred_fallthru
          _
        %p1378 = scmp.eq.s32.totalorder %s35, 3
        %p1379 = pnand %p1378, %p481
        %p1380 = pneg %p1379
        // Predicated region
        $region93: #{tpu_custom_call.1} parent=51 // pred_check
          _
        $region94: #{tpu_custom_call.1} parent=51 // pred_check_branch
          %1382 = sbr.rel (%p1379) target = $region96
        $region95: #{tpu_custom_call.1} parent=51 // pred_region
          %s1383 = scalar_lea.vmem [#allocation2], %s474
          %v1384 = vld [vmem:[%s1383] sm:$0xff]
          %v1385 = vld [vmem:[%s1383 + $0x8] sm:$0xff]
          %v1386 = vld [vmem:[%s1383 + $0x10] sm:$0xff]
          %v1387 = vld [vmem:[%s1383 + $0x18] sm:$0xff]
          %v1388 = vld [vmem:[%s1383 + $0x20] sm:$0xff]
          %v1389 = vld [vmem:[%s1383 + $0x28] sm:$0xff]
          %v1390 = vld [vmem:[%s1383 + $0x30] sm:$0xff]
          %v1391 = vld [vmem:[%s1383 + $0x38] sm:$0xff]
          %v1392 = vld [vmem:[%s1383 + $0x40] sm:$0xff]
          %v1393 = vld [vmem:[%s1383 + $0x48] sm:$0xff]
          %v1394 = vld [vmem:[%s1383 + $0x50] sm:$0xff]
          %v1395 = vld [vmem:[%s1383 + $0x58] sm:$0xff]
          %v1396 = vld [vmem:[%s1383 + $0x60] sm:$0xff]
          %v1397 = vld [vmem:[%s1383 + $0x68] sm:$0xff]
          %v1398 = vld [vmem:[%s1383 + $0x70] sm:$0xff]
          %v1399 = vld [vmem:[%s1383 + $0x78] sm:$0xff]
          %v1400 = vld [vmem:[#allocation15] sm:$0xff]
          %v1401 = vld [vmem:[#allocation15 + $0x8] sm:$0xff]
          %v1402 = vld [vmem:[#allocation15 + $0x10] sm:$0xff]
          %v1403 = vld [vmem:[#allocation15 + $0x18] sm:$0xff]
          %v1404 = vld [vmem:[#allocation15 + $0x20] sm:$0xff]
          %v1405 = vld [vmem:[#allocation15 + $0x28] sm:$0xff]
          %v1406 = vld [vmem:[#allocation15 + $0x30] sm:$0xff]
          %v1407 = vld [vmem:[#allocation15 + $0x38] sm:$0xff]
          %v1408 = vld [vmem:[#allocation15 + $0x40] sm:$0xff]
          %v1409 = vld [vmem:[#allocation15 + $0x48] sm:$0xff]
          %v1410 = vld [vmem:[#allocation15 + $0x50] sm:$0xff]
          %v1411 = vld [vmem:[#allocation15 + $0x58] sm:$0xff]
          %v1412 = vld [vmem:[#allocation15 + $0x60] sm:$0xff]
          %v1413 = vld [vmem:[#allocation15 + $0x68] sm:$0xff]
          %v1414 = vld [vmem:[#allocation15 + $0x70] sm:$0xff]
          %v1415 = vld [vmem:[#allocation15 + $0x78] sm:$0xff]
          %v1416 = vld [vmem:[%s7] sm:$0x1]
          %v1418 = vlaneseq
          %v1419 = vshrl.u32 %v1418, 7
          %v1420 = vsub.s32 0, %v1419
          %v1421 = vrot.slane %v1416, %v1420
          %1423 = vmatprep.subr.mxu0 0.0
          %1424 = vmatpush1.msra.mxu0 %v1415
          %1425 = vmatprep.subr.mxu0 0.0
          %1426 = vmatpush1.msra.mxu0 %v1414
          %1427 = vmatprep.subr.mxu0 0.0
          %1428 = vmatpush1.msra.mxu0 %v1413
          %1429 = vmatprep.subr.mxu0 0.0
          %1430 = vmatpush1.msra.mxu0 %v1412
          %1431 = vmatprep.subr.mxu0 0.0
          %1432 = vmatpush1.msra.mxu0 %v1411
          %1433 = vmatprep.subr.mxu0 0.0
          %1434 = vmatpush1.msra.mxu0 %v1410
          %1435 = vmatprep.subr.mxu0 0.0
          %1436 = vmatpush1.msra.mxu0 %v1409
          %1437 = vmatprep.subr.mxu0 0.0
          %1438 = vmatpush1.msra.mxu0 %v1408
          %1439 = vmatprep.subr.mxu0 0.0
          %1440 = vmatpush1.msra.mxu0 %v1407
          %1441 = vmatprep.subr.mxu0 0.0
          %1442 = vmatpush1.msra.mxu0 %v1406
          %1443 = vmatprep.subr.mxu0 0.0
          %1444 = vmatpush1.msra.mxu0 %v1405
          %1445 = vmatprep.subr.mxu0 0.0
          %1446 = vmatpush1.msra.mxu0 %v1404
          %1447 = vmatprep.subr.mxu0 0.0
          %1448 = vmatpush1.msra.mxu0 %v1403
          %1449 = vmatprep.subr.mxu0 0.0
          %1450 = vmatpush1.msra.mxu0 %v1402
          %1451 = vmatprep.subr.mxu0 0.0
          %1452 = vmatpush1.msra.mxu0 %v1401
          %1453 = vmatprep.subr.mxu0 0.0
          %1454 = vmatpush1.msra.mxu0 %v1400
          %1455 = vmatprep.subr.mxu0 0.0
          %1456 = vmatpush2.msra.mxu0 0.0
          %1457 = vmatprep.subr.mxu0 0.0
          %1458 = vmatpush2.msra.mxu0 0.0
          %1459 = vmatprep.subr.mxu0 0.0
          %1460 = vmatpush2.msra.mxu0 0.0
          %1461 = vmatprep.subr.mxu0 0.0
          %1462 = vmatpush2.msra.mxu0 0.0
          %1463 = vmatprep.subr.mxu0 0.0
          %1464 = vmatpush2.msra.mxu0 0.0
          %1465 = vmatprep.subr.mxu0 0.0
          %1466 = vmatpush2.msra.mxu0 0.0
          %1467 = vmatprep.subr.mxu0 0.0
          %1468 = vmatpush2.msra.mxu0 0.0
          %1469 = vmatprep.subr.mxu0 0.0
          %1470 = vmatpush2.msra.mxu0 0.0
          %1471 = vmatprep.subr.mxu0 0.0
          %1472 = vmatpush2.msra.mxu0 0.0
          %1473 = vmatprep.subr.mxu0 0.0
          %1474 = vmatpush2.msra.mxu0 0.0
          %1475 = vmatprep.subr.mxu0 0.0
          %1476 = vmatpush2.msra.mxu0 0.0
          %1477 = vmatprep.subr.mxu0 0.0
          %1478 = vmatpush2.msra.mxu0 0.0
          %1479 = vmatprep.subr.mxu0 0.0
          %1480 = vmatpush2.msra.mxu0 0.0
          %1481 = vmatprep.subr.mxu0 0.0
          %1482 = vmatpush2.msra.mxu0 0.0
          %1483 = vmatprep.subr.mxu0 0.0
          %1484 = vmatpush2.msra.mxu0 0.0
          %1485 = vmatprep.subr.mxu0 0.0
          %1486 = vmatpush2.msra.mxu0 0.0
          %1487 = vmatprep.mubr.f32.mxu0 0.0
          %1488 = vmatmul.mubr.f32.gmra.mxu0 %v1384
          %v1489 = vpop.f32.mrf.mxu0
          %v1490 = vadd.f32 %v1421, %v1489
          %v1491 = vpop.f32.mrf.mxu0
          %1492 = vmatprep.mubr.f32.mxu0 0.0
          %1493 = vmatmul.mubr.f32.gmra.mxu0 %v1385
          %v1494 = vpop.f32.mrf.mxu0
          %v1495 = vadd.f32 %v1421, %v1494
          %v1496 = vpop.f32.mrf.mxu0
          %1497 = vmatprep.mubr.f32.mxu0 0.0
          %1498 = vmatmul.mubr.f32.gmra.mxu0 %v1386
          %v1499 = vpop.f32.mrf.mxu0
          %v1500 = vadd.f32 %v1421, %v1499
          %v1501 = vpop.f32.mrf.mxu0
          %1502 = vmatprep.mubr.f32.mxu0 0.0
          %1503 = vmatmul.mubr.f32.gmra.mxu0 %v1387
          %v1504 = vpop.f32.mrf.mxu0
          %v1505 = vadd.f32 %v1421, %v1504
          %v1506 = vpop.f32.mrf.mxu0
          %1507 = vmatprep.mubr.f32.mxu0 0.0
          %1508 = vmatmul.mubr.f32.gmra.mxu0 %v1388
          %v1509 = vpop.f32.mrf.mxu0
          %v1510 = vadd.f32 %v1421, %v1509
          %v1511 = vpop.f32.mrf.mxu0
          %1512 = vmatprep.mubr.f32.mxu0 0.0
          %1513 = vmatmul.mubr.f32.gmra.mxu0 %v1389
          %v1514 = vpop.f32.mrf.mxu0
          %v1515 = vadd.f32 %v1421, %v1514
          %v1516 = vpop.f32.mrf.mxu0
          %1517 = vmatprep.mubr.f32.mxu0 0.0
          %1518 = vmatmul.mubr.f32.gmra.mxu0 %v1390
          %v1519 = vpop.f32.mrf.mxu0
          %v1520 = vadd.f32 %v1421, %v1519
          %v1521 = vpop.f32.mrf.mxu0
          %1522 = vmatprep.mubr.f32.mxu0 0.0
          %1523 = vmatmul.mubr.f32.gmra.mxu0 %v1391
          %v1524 = vpop.f32.mrf.mxu0
          %v1525 = vadd.f32 %v1421, %v1524
          %v1526 = vpop.f32.mrf.mxu0
          %1527 = vmatprep.mubr.f32.mxu0 0.0
          %1528 = vmatmul.mubr.f32.gmra.mxu0 %v1392
          %v1529 = vpop.f32.mrf.mxu0
          %v1530 = vadd.f32 %v1421, %v1529
          %v1531 = vpop.f32.mrf.mxu0
          %1532 = vmatprep.mubr.f32.mxu0 0.0
          %1533 = vmatmul.mubr.f32.gmra.mxu0 %v1393
          %v1534 = vpop.f32.mrf.mxu0
          %v1535 = vadd.f32 %v1421, %v1534
          %v1536 = vpop.f32.mrf.mxu0
          %1537 = vmatprep.mubr.f32.mxu0 0.0
          %1538 = vmatmul.mubr.f32.gmra.mxu0 %v1394
          %v1539 = vpop.f32.mrf.mxu0
          %v1540 = vadd.f32 %v1421, %v1539
          %v1541 = vpop.f32.mrf.mxu0
          %1542 = vmatprep.mubr.f32.mxu0 0.0
          %1543 = vmatmul.mubr.f32.gmra.mxu0 %v1395
          %v1544 = vpop.f32.mrf.mxu0
          %v1545 = vadd.f32 %v1421, %v1544
          %v1546 = vpop.f32.mrf.mxu0
          %1547 = vmatprep.mubr.f32.mxu0 0.0
          %1548 = vmatmul.mubr.f32.gmra.mxu0 %v1396
          %v1549 = vpop.f32.mrf.mxu0
          %v1550 = vadd.f32 %v1421, %v1549
          %v1551 = vpop.f32.mrf.mxu0
          %1552 = vmatprep.mubr.f32.mxu0 0.0
          %1553 = vmatmul.mubr.f32.gmra.mxu0 %v1397
          %v1554 = vpop.f32.mrf.mxu0
          %v1555 = vadd.f32 %v1421, %v1554
          %v1556 = vpop.f32.mrf.mxu0
          %1557 = vmatprep.mubr.f32.mxu0 0.0
          %1558 = vmatmul.mubr.f32.gmra.mxu0 %v1398
          %v1559 = vpop.f32.mrf.mxu0
          %v1560 = vadd.f32 %v1421, %v1559
          %v1561 = vpop.f32.mrf.mxu0
          %1562 = vmatprep.mubr.f32.mxu0 0.0
          %1563 = vmatmul.mubr.f32.gmra.mxu0 %v1399
          %v1564 = vpop.f32.mrf.mxu0
          %v1565 = vadd.f32 %v1421, %v1564
          %v1566 = vpop.f32.mrf.mxu0
          %1567 = vdwg.mxu0
          %1568 = vst [vmem:[%s462] sm:$0xff] %v1490
          %1569 = vst [vmem:[%s462 + $0x8] sm:$0xff] %v1495
          %1570 = vst [vmem:[%s462 + $0x10] sm:$0xff] %v1500
          %1571 = vst [vmem:[%s462 + $0x18] sm:$0xff] %v1505
          %1572 = vst [vmem:[%s462 + $0x20] sm:$0xff] %v1510
          %1573 = vst [vmem:[%s462 + $0x28] sm:$0xff] %v1515
          %1574 = vst [vmem:[%s462 + $0x30] sm:$0xff] %v1520
          %1575 = vst [vmem:[%s462 + $0x38] sm:$0xff] %v1525
          %1576 = vst [vmem:[%s462 + $0x40] sm:$0xff] %v1530
          %1577 = vst [vmem:[%s462 + $0x48] sm:$0xff] %v1535
          %1578 = vst [vmem:[%s462 + $0x50] sm:$0xff] %v1540
          %1579 = vst [vmem:[%s462 + $0x58] sm:$0xff] %v1545
          %1580 = vst [vmem:[%s462 + $0x60] sm:$0xff] %v1550
          %1581 = vst [vmem:[%s462 + $0x68] sm:$0xff] %v1555
          %1582 = vst [vmem:[%s462 + $0x70] sm:$0xff] %v1560
          %1583 = vst [vmem:[%s462 + $0x78] sm:$0xff] %v1565
        $region96: #{tpu_custom_call.1} parent=51 // pred_fallthru
          _
        %s1584 = sand.u32 %s253, 1
        %s1585 = scalar_lea.sflag [#allocation7], %s1584
        %s1586 = sand.u32 %s253, 1
        %s1587 = smul.addr %s1586, 128
        %s1588 = scalar_lea.vmem [#allocation16], %s1587
        // Predicated region
        $region97: #{tpu_custom_call.1} parent=51 // pred_check
          %p1589 = pneg %p263
        $region98: #{tpu_custom_call.1} parent=51 // pred_check_branch
          %1591 = sbr.rel (%p1589) target = $region100
        $region99: #{tpu_custom_call.1} parent=51 // pred_region
          %p1592 = scmp.eq.s32.totalorder %s35, 3
          %s1593 = scalar_select %p1592, %s36, 0
          %s1594 = smul.u32 16, %s1593
          %s1596 = ssub.s32 2048, 2048
          %1597 = vsyncadd %s1585, %s1596
          %s1598 = smul.addr %s1594, 128
          %s1599 = scalar_lea.hbm %s8, %s1598
          %s1600 = sshll.u32 %s1588, 4
          %s1601 = int_to_ptr.vmem [resolvable:$true] %s1600
          %1606 = dma.vmem_to_hbm [thread:$0]  %s1601, 2048, %s1599, %s1585, 128, 128, 8
        $region100: #{tpu_custom_call.1} parent=51 // pred_fallthru
          _
      $region52: #{tpu_custom_call.1} parent=5 // pred_fallthru
        _
      %p1607 = scmp.le.s32.totalorder 2, %s25
      // Predicated region
      $region101: #{tpu_custom_call.1} parent=5 // pred_check
        %p1608 = pneg %p1607
      $region102: #{tpu_custom_call.1} parent=5 // pred_check_branch
        %1610 = sbr.rel (%p1608) target = $region104
      $region103: #{tpu_custom_call.1} parent=5 // pred_region
        %s1611 = ssub.s32 %s25, 2
        // Predicated region
        $region105: #{tpu_custom_call.1} parent=103 // pred_check
          %p1612 = pneg %p269
        $region106: #{tpu_custom_call.1} parent=103 // pred_check_branch
          %1614 = sbr.rel (%p1612) target = $region108
        $region107: #{tpu_custom_call.1} parent=103 // pred_region
          %s1615 = sand.u32 %s254, 1
          %s1616 = scalar_lea.sflag [#allocation7], %s1615
          %s1617 = sand.u32 %s254, 1
          %s1618 = smul.addr %s1617, 128
          %s1619 = scalar_lea.vmem [#allocation16], %s1618
          %1620 = dma.done %s1616, 2048
        $region108: #{tpu_custom_call.1} parent=103 // pred_fallthru
          _
      $region104: #{tpu_custom_call.1} parent=5 // pred_fallthru
        _
    $region6: #{tpu_custom_call.1} parent=1 // loop_footer
      %s29 = sadd.s32 1, %s25
    $region7: #{tpu_custom_call.1} parent=1 // loop_footer_branch
      %24 = sbr.rel target = $region3
    $region8: #{tpu_custom_call.1} parent=1 // loop_exit
      _
    %1621 = vsyncpa [#allocation6], 1
    %s1622 = scalar_lea.sflag [#allocation6], 1
    %1623 = vsyncpa %s1622, 1
    %1624 = vsyncpa [#allocation11], 1
    %1625 = vsyncpa [#allocation14], 1
    %s1626 = scalar_lea.sflag [#allocation14], 1
    %1627 = vsyncpa %s1626, 1
    %1628 = vsyncpa [#allocation7], 1
    %s1629 = scalar_lea.sflag [#allocation7], 1
    %1630 = vsyncpa %s1629, 1
    %1631 = vsyncpa [#allocation8], 1
    %s1632 = scalar_lea.sflag [#allocation8], 1
    %1633 = vsyncpa %s1632, 1

</llo_original>
